<compile_context>
chip_gen: v6e
topology: v6e:2x2x1
jax: 0.10.0
libtpu: 0.0.40
codegen_flags: <defaults>
</compile_context>

<pallas_src>
import jax
import jax.numpy as jnp
from jax.experimental import pallas as pl
from jax.experimental.pallas import tpu as pltpu

# ----- static model config (consistent with the PyTorch module) -----
NUM_HEADS = 4
HEAD_SIZE = 8
N_EMBD = 32
BLOCK_SIZE = 16          # max sequence length (tril buffer size)
EMBED_DIM = 32           # choices['embed_dim'] (== n_embd here)
DROPOUT = 0.0            # eval mode / p=0 -> identity

QKV_WIDTH = 3 * NUM_HEADS * HEAD_SIZE     # 96 fused projection columns
_Q0 = 0
_K0 = NUM_HEADS * HEAD_SIZE
_V0 = 2 * NUM_HEADS * HEAD_SIZE
_NEG = -1e30  # large finite negative: softmax stays NaN-free even for fully-masked rows


def mha_kernel(x_ref, wqkv_ref, wpT_ref, o_ref):
    # x_ref: (Bb, T, C) block covering Bb batch elements of one grid step.
    bb, T, C = x_ref.shape
    rows = bb * T
    scale = HEAD_SIZE ** (-0.5)

    x = x_ref[...].reshape(rows, C)[:, :EMBED_DIM]               # (rows, E)

    # Fused Q/K/V projection for ALL heads: one MXU-shaped matmul, weights already
    # transposed in the wrapper (no .T / XLU work here).
    qkv = jnp.dot(x, wqkv_ref[...], preferred_element_type=jnp.float32)  # (rows, 96)
    qkv = qkv.reshape(bb, T, QKV_WIDTH)

    # Causal mask built once per grid step, broadcast over the folded batch dim.
    r = jax.lax.broadcasted_iota(jnp.int32, (T, T), 0)
    c = jax.lax.broadcasted_iota(jnp.int32, (T, T), 1)
    causal = (r >= c)[None, :, :]                                # (1, T, T)

    acc = jnp.zeros((rows, EMBED_DIM), jnp.float32)
    for h in range(NUM_HEADS):                                   # static unroll (4 heads)
        q = qkv[:, :, _Q0 + h * HEAD_SIZE: _Q0 + (h + 1) * HEAD_SIZE]   # (Bb, T, HS)
        k = qkv[:, :, _K0 + h * HEAD_SIZE: _K0 + (h + 1) * HEAD_SIZE]
        v = qkv[:, :, _V0 + h * HEAD_SIZE: _V0 + (h + 1) * HEAD_SIZE]

        # Scores batched over Bb, contracting the head dim directly (no k.T).
        s = jnp.einsum('bqd,bkd->bqk', q, k,
                       preferred_element_type=jnp.float32) * scale      # (Bb, T, T)
        s = jnp.where(causal, s, _NEG)

        # numerically-stable softmax along last axis (kept in f32 on all generations)
        m = jnp.max(s, axis=-1, keepdims=True)
        p = jnp.exp(s - m)
        p = p / jnp.sum(p, axis=-1, keepdims=True)
        # TODO(synk): dropout on attention weights omitted (eval mode / p=0.0).

        o_h = jnp.einsum('bqk,bkd->bqd', p, v,
                         preferred_element_type=jnp.float32)            # (Bb, T, HS)

        # Output projection folded into the head loop: no lane-dim concat needed.
        acc = acc + jnp.dot(o_h.reshape(rows, HEAD_SIZE), wpT_ref[h],
                            preferred_element_type=jnp.float32)         # (rows, E)

    o_ref[...] = acc.reshape(bb, T, EMBED_DIM).astype(o_ref.dtype)


def _pick_batch_block(B, T, target_rows=256):
    """Largest divisor of B with Bb*T <= target_rows; prefer >=2 grid steps (v7x megacore)."""
    bb_max = max(1, target_rows // T)
    divisors = [d for d in range(1, B + 1) if B % d == 0 and d <= bb_max]
    best = max(divisors) if divisors else 1
    if B > 1 and B // best < 2:
        two_step = [d for d in divisors if B // d >= 2]
        if two_step:
            best = max(two_step)
    return best


def multi_head_attention(x, wk, wq, wv, wp):
    """x: (B, T, C) f32; wk/wq/wv: (H, head_size, embed_dim); wp: (embed_dim, embed_dim)."""
    B, T, C = x.shape

    # ---- wrapper-side weight restack (free layout plumbing, outside the kernel) ----
    # Wqkv: (E, 3*H*HS), pre-transposed, so all q/k/v projections come from one matmul.
    def stack_t(w):  # (H, HS, E) -> (E, H*HS)
        return jnp.transpose(w, (2, 0, 1)).reshape(EMBED_DIM, NUM_HEADS * HEAD_SIZE)

    wqkv = jnp.concatenate(
        [stack_t(wq[:, :, :EMBED_DIM]),
         stack_t(wk[:, :, :EMBED_DIM]),
         stack_t(wv[:, :, :EMBED_DIM])], axis=1)                      # (E, 3*H*HS)

    # Wp^T split per head: (H, HS, E) so the projection accumulates per head in-kernel.
    wpT = jnp.transpose(wp, (1, 0)).reshape(NUM_HEADS, HEAD_SIZE, EMBED_DIM)

    bb = _pick_batch_block(B, T)
    grid = (B // bb,)

    return pl.pallas_call(
        mha_kernel,
        out_shape=jax.ShapeDtypeStruct((B, T, EMBED_DIM), jnp.float32),
        grid_spec=pltpu.PrefetchScalarGridSpec(
            num_scalar_prefetch=0,
            grid=grid,
            in_specs=[
                pl.BlockSpec((bb, T, C), lambda b: (b, 0, 0)),
                pl.BlockSpec((EMBED_DIM, QKV_WIDTH), lambda b: (0, 0)),
                pl.BlockSpec((NUM_HEADS, HEAD_SIZE, EMBED_DIM), lambda b: (0, 0, 0)),
            ],
            out_specs=pl.BlockSpec((bb, T, EMBED_DIM), lambda b: (b, 0, 0)),
        ),
        compiler_params=pltpu.CompilerParams(
            dimension_semantics=("parallel",)),
    )(x, wqkv, wpT)


def reference(x, wk, wq, wv, wp):
    """Pure-JAX mirror of the PyTorch forward (eval mode, no bias)."""
    x_e = x[:, :, :EMBED_DIM]
    T = x.shape[1]
    causal = jnp.tril(jnp.ones((T, T), dtype=bool))
    outs = []
    for h in range(NUM_HEADS):
        k = x_e @ wk[h].T
        q = x_e @ wq[h].T
        v = x_e @ wv[h].T
        wei = (q @ jnp.swapaxes(k, -2, -1)) * (HEAD_SIZE ** -0.5)
        wei = jnp.where(causal, wei, -jnp.inf)
        wei = jax.nn.softmax(wei, axis=-1)
        outs.append(wei @ v)
    cat = jnp.concatenate(outs, axis=-1)[:, :, :EMBED_DIM]
    return cat @ wp.T


if __name__ == "__main__":
    key = jax.random.PRNGKey(0)
    kx, kk, kq, kv, kp = jax.random.split(key, 5)

    B, T, C = 2, BLOCK_SIZE, N_EMBD
    x = jax.random.normal(kx, (B, T, C), dtype=jnp.float32)

    # Deterministic parameter init (nn.Linear default: U(-1/sqrt(fan_in), 1/sqrt(fan_in)))
    bound = 1.0 / (N_EMBD ** 0.5)
    wk = jax.random.uniform(kk, (NUM_HEADS, HEAD_SIZE, EMBED_DIM), jnp.float32, -bound, bound)
    wq = jax.random.uniform(kq, (NUM_HEADS, HEAD_SIZE, EMBED_DIM), jnp.float32, -bound, bound)
    wv = jax.random.uniform(kv, (NUM_HEADS, HEAD_SIZE, EMBED_DIM), jnp.float32, -bound, bound)
    wp = jax.random.uniform(kp, (EMBED_DIM, EMBED_DIM), jnp.float32, -bound, bound)

    out = jax.block_until_ready(multi_head_attention(x, wk, wq, wv, wp))

    ref = reference(x, wk, wq, wv, wp)
    assert out.shape == (B, T, EMBED_DIM)
    assert jnp.allclose(out, ref, atol=1e-4, rtol=1e-4), "mismatch vs JAX reference"

    print("KERNEL_OK")
</pallas_src>

<mosaic_0001>
module attributes {stable_mosaic.version = 11 : i64} {
  func.func @mha_kernel(%arg0: i32, %arg1: memref<1x16x32xf32, #tpu.memory_space<vmem>>, %arg2: memref<32x96xf32, #tpu.memory_space<vmem>>, %arg3: memref<4x8x32xf32, #tpu.memory_space<vmem>>, %arg4: memref<1x16x32xf32, #tpu.memory_space<vmem>>) attributes {dimension_semantics = [#tpu.dimension_semantics<parallel>], iteration_bounds = array<i64: 2>, scalar_prefetch = 0 : i64, scratch_operands = 0 : i64, tpu.core_type = #tpu.core_type<tc>, window_params = [{transform_indices = @transform_0, window_bounds = array<i64: 1, 16, 32>}, {pipeline_mode = #tpu.pipeline_mode<synchronous>, transform_indices = @transform_1, window_bounds = array<i64: 32, 96>}, {pipeline_mode = #tpu.pipeline_mode<synchronous>, transform_indices = @transform_2, window_bounds = array<i64: 4, 8, 32>}, {transform_indices = @transform_3, window_bounds = array<i64: 1, 16, 32>}]} {
    %c0 = arith.constant 0 : index
    %c0_0 = arith.constant 0 : index
    %c0_1 = arith.constant 0 : index
    %0 = vector.load %arg1[%c0, %c0_0, %c0_1] : memref<1x16x32xf32, #tpu.memory_space<vmem>>, vector<1x16x32xf32>
    %1 = vector.shape_cast %0 : vector<1x16x32xf32> to vector<16x32xf32>
    %c0_2 = arith.constant 0 : index
    %c0_3 = arith.constant 0 : index
    %2 = vector.load %arg2[%c0_2, %c0_3] : memref<32x96xf32, #tpu.memory_space<vmem>>, vector<32x96xf32>
    %cst = arith.constant dense<0.000000e+00> : vector<16x96xf32>
    %3 = tpu.matmul %1, %2, %cst {dimension_numbers = #tpu.dot_dimension_numbers<[1], [0], [0], [1], [0, 0, 1, 1], [], []>} : vector<16x32xf32>, vector<32x96xf32>, vector<16x96xf32> -> vector<16x96xf32>
    %4 = vector.shape_cast %3 : vector<16x96xf32> to vector<1x16x96xf32>
    %5 = tpu.iota {dimensions = array<i32: 0>} : vector<16x16xi32>
    %6 = tpu.iota {dimensions = array<i32: 1>} : vector<16x16xi32>
    %7 = arith.cmpi sge, %5, %6 : vector<16x16xi32>
    %8 = vector.shape_cast %7 : vector<16x16xi1> to vector<1x16x16xi1>
    %cst_4 = arith.constant 0.000000e+00 : f32
    %9 = vector.broadcast %cst_4 : f32 to vector<16x32xf32>
    %10 = vector.extract_strided_slice %4 {offsets = [0, 0, 0], sizes = [1, 16, 8], strides = [1, 1, 1]} : vector<1x16x96xf32> to vector<1x16x8xf32>
    %11 = vector.extract_strided_slice %4 {offsets = [0, 0, 32], sizes = [1, 16, 8], strides = [1, 1, 1]} : vector<1x16x96xf32> to vector<1x16x8xf32>
    %12 = vector.extract_strided_slice %4 {offsets = [0, 0, 64], sizes = [1, 16, 8], strides = [1, 1, 1]} : vector<1x16x96xf32> to vector<1x16x8xf32>
    "tpu.trace_start"() <{level = 10 : i32, message = "bqd,bkd->bqk"}> : () -> ()
    %cst_5 = arith.constant dense<0.000000e+00> : vector<1x16x16xf32>
    %13 = tpu.matmul %10, %11, %cst_5 {dimension_numbers = #tpu.dot_dimension_numbers<[2], [2], [1], [1], [0, 0, 0, 1, 1, 1], [0], [0]>} : vector<1x16x8xf32>, vector<1x16x8xf32>, vector<1x16x16xf32> -> vector<1x16x16xf32>
    "tpu.trace_stop"() : () -> ()
    %cst_6 = arith.constant 0.353553385 : f32
    %14 = vector.broadcast %cst_6 : f32 to vector<1x16x16xf32>
    %15 = arith.mulf %13, %14 : vector<1x16x16xf32>
    %cst_7 = arith.constant -1.000000e+30 : f32
    %16 = vector.broadcast %cst_7 : f32 to vector<1x16x16xf32>
    %17 = arith.select %8, %15, %16 : vector<1x16x16xi1>, vector<1x16x16xf32>
    %cst_8 = arith.constant dense<0xFF800000> : vector<1x16xf32>
    %18 = vector.multi_reduction <maximumf>, %17, %cst_8 [2] : vector<1x16x16xf32> to vector<1x16xf32>
    %19 = vector.shape_cast %18 : vector<1x16xf32> to vector<1x16x1xf32>
    %20 = vector.broadcast %19 : vector<1x16x1xf32> to vector<1x16x16xf32>
    %21 = arith.subf %17, %20 : vector<1x16x16xf32>
    %22 = math.exp %21 : vector<1x16x16xf32>
    %cst_9 = arith.constant dense<0.000000e+00> : vector<1x16xf32>
    %23 = vector.multi_reduction <add>, %22, %cst_9 [2] : vector<1x16x16xf32> to vector<1x16xf32>
    %24 = vector.shape_cast %23 : vector<1x16xf32> to vector<1x16x1xf32>
    %25 = vector.broadcast %24 : vector<1x16x1xf32> to vector<1x16x16xf32>
    %26 = arith.divf %22, %25 : vector<1x16x16xf32>
    "tpu.trace_start"() <{level = 10 : i32, message = "bqk,bkd->bqd"}> : () -> ()
    %cst_10 = arith.constant dense<0.000000e+00> : vector<1x16x8xf32>
    %27 = tpu.matmul %26, %12, %cst_10 {dimension_numbers = #tpu.dot_dimension_numbers<[2], [1], [1], [2], [0, 0, 0, 1, 1, 2], [0], [0]>} : vector<1x16x16xf32>, vector<1x16x8xf32>, vector<1x16x8xf32> -> vector<1x16x8xf32>
    "tpu.trace_stop"() : () -> ()
    %28 = vector.shape_cast %27 : vector<1x16x8xf32> to vector<16x8xf32>
    %c0_11 = arith.constant 0 : index
    %c0_12 = arith.constant 0 : index
    %c0_13 = arith.constant 0 : index
    %29 = vector.load %arg3[%c0_11, %c0_12, %c0_13] : memref<4x8x32xf32, #tpu.memory_space<vmem>>, vector<1x8x32xf32>
    %30 = vector.shape_cast %29 : vector<1x8x32xf32> to vector<8x32xf32>
    %cst_14 = arith.constant dense<0.000000e+00> : vector<16x32xf32>
    %31 = tpu.matmul %28, %30, %cst_14 {dimension_numbers = #tpu.dot_dimension_numbers<[1], [0], [0], [1], [0, 0, 1, 1], [], []>} : vector<16x8xf32>, vector<8x32xf32>, vector<16x32xf32> -> vector<16x32xf32>
    %32 = arith.addf %9, %31 : vector<16x32xf32>
    %33 = vector.extract_strided_slice %4 {offsets = [0, 0, 8], sizes = [1, 16, 8], strides = [1, 1, 1]} : vector<1x16x96xf32> to vector<1x16x8xf32>
    %34 = vector.extract_strided_slice %4 {offsets = [0, 0, 40], sizes = [1, 16, 8], strides = [1, 1, 1]} : vector<1x16x96xf32> to vector<1x16x8xf32>
    %35 = vector.extract_strided_slice %4 {offsets = [0, 0, 72], sizes = [1, 16, 8], strides = [1, 1, 1]} : vector<1x16x96xf32> to vector<1x16x8xf32>
    "tpu.trace_start"() <{level = 10 : i32, message = "bqd,bkd->bqk"}> : () -> ()
    %cst_15 = arith.constant dense<0.000000e+00> : vector<1x16x16xf32>
    %36 = tpu.matmul %33, %34, %cst_15 {dimension_numbers = #tpu.dot_dimension_numbers<[2], [2], [1], [1], [0, 0, 0, 1, 1, 1], [0], [0]>} : vector<1x16x8xf32>, vector<1x16x8xf32>, vector<1x16x16xf32> -> vector<1x16x16xf32>
    "tpu.trace_stop"() : () -> ()
    %cst_16 = arith.constant 0.353553385 : f32
    %37 = vector.broadcast %cst_16 : f32 to vector<1x16x16xf32>
    %38 = arith.mulf %36, %37 : vector<1x16x16xf32>
    %cst_17 = arith.constant -1.000000e+30 : f32
    %39 = vector.broadcast %cst_17 : f32 to vector<1x16x16xf32>
    %40 = arith.select %8, %38, %39 : vector<1x16x16xi1>, vector<1x16x16xf32>
    %cst_18 = arith.constant dense<0xFF800000> : vector<1x16xf32>
    %41 = vector.multi_reduction <maximumf>, %40, %cst_18 [2] : vector<1x16x16xf32> to vector<1x16xf32>
    %42 = vector.shape_cast %41 : vector<1x16xf32> to vector<1x16x1xf32>
    %43 = vector.broadcast %42 : vector<1x16x1xf32> to vector<1x16x16xf32>
    %44 = arith.subf %40, %43 : vector<1x16x16xf32>
    %45 = math.exp %44 : vector<1x16x16xf32>
    %cst_19 = arith.constant dense<0.000000e+00> : vector<1x16xf32>
    %46 = vector.multi_reduction <add>, %45, %cst_19 [2] : vector<1x16x16xf32> to vector<1x16xf32>
    %47 = vector.shape_cast %46 : vector<1x16xf32> to vector<1x16x1xf32>
    %48 = vector.broadcast %47 : vector<1x16x1xf32> to vector<1x16x16xf32>
    %49 = arith.divf %45, %48 : vector<1x16x16xf32>
    "tpu.trace_start"() <{level = 10 : i32, message = "bqk,bkd->bqd"}> : () -> ()
    %cst_20 = arith.constant dense<0.000000e+00> : vector<1x16x8xf32>
    %50 = tpu.matmul %49, %35, %cst_20 {dimension_numbers = #tpu.dot_dimension_numbers<[2], [1], [1], [2], [0, 0, 0, 1, 1, 2], [0], [0]>} : vector<1x16x16xf32>, vector<1x16x8xf32>, vector<1x16x8xf32> -> vector<1x16x8xf32>
    "tpu.trace_stop"() : () -> ()
    %51 = vector.shape_cast %50 : vector<1x16x8xf32> to vector<16x8xf32>
    %c1 = arith.constant 1 : index
    %c0_21 = arith.constant 0 : index
    %c0_22 = arith.constant 0 : index
    %52 = vector.load %arg3[%c1, %c0_21, %c0_22] : memref<4x8x32xf32, #tpu.memory_space<vmem>>, vector<1x8x32xf32>
    %53 = vector.shape_cast %52 : vector<1x8x32xf32> to vector<8x32xf32>
    %cst_23 = arith.constant dense<0.000000e+00> : vector<16x32xf32>
    %54 = tpu.matmul %51, %53, %cst_23 {dimension_numbers = #tpu.dot_dimension_numbers<[1], [0], [0], [1], [0, 0, 1, 1], [], []>} : vector<16x8xf32>, vector<8x32xf32>, vector<16x32xf32> -> vector<16x32xf32>
    %55 = arith.addf %32, %54 : vector<16x32xf32>
    %56 = vector.extract_strided_slice %4 {offsets = [0, 0, 16], sizes = [1, 16, 8], strides = [1, 1, 1]} : vector<1x16x96xf32> to vector<1x16x8xf32>
    %57 = vector.extract_strided_slice %4 {offsets = [0, 0, 48], sizes = [1, 16, 8], strides = [1, 1, 1]} : vector<1x16x96xf32> to vector<1x16x8xf32>
    %58 = vector.extract_strided_slice %4 {offsets = [0, 0, 80], sizes = [1, 16, 8], strides = [1, 1, 1]} : vector<1x16x96xf32> to vector<1x16x8xf32>
    "tpu.trace_start"() <{level = 10 : i32, message = "bqd,bkd->bqk"}> : () -> ()
    %cst_24 = arith.constant dense<0.000000e+00> : vector<1x16x16xf32>
    %59 = tpu.matmul %56, %57, %cst_24 {dimension_numbers = #tpu.dot_dimension_numbers<[2], [2], [1], [1], [0, 0, 0, 1, 1, 1], [0], [0]>} : vector<1x16x8xf32>, vector<1x16x8xf32>, vector<1x16x16xf32> -> vector<1x16x16xf32>
    "tpu.trace_stop"() : () -> ()
    %cst_25 = arith.constant 0.353553385 : f32
    %60 = vector.broadcast %cst_25 : f32 to vector<1x16x16xf32>
    %61 = arith.mulf %59, %60 : vector<1x16x16xf32>
    %cst_26 = arith.constant -1.000000e+30 : f32
    %62 = vector.broadcast %cst_26 : f32 to vector<1x16x16xf32>
    %63 = arith.select %8, %61, %62 : vector<1x16x16xi1>, vector<1x16x16xf32>
    %cst_27 = arith.constant dense<0xFF800000> : vector<1x16xf32>
    %64 = vector.multi_reduction <maximumf>, %63, %cst_27 [2] : vector<1x16x16xf32> to vector<1x16xf32>
    %65 = vector.shape_cast %64 : vector<1x16xf32> to vector<1x16x1xf32>
    %66 = vector.broadcast %65 : vector<1x16x1xf32> to vector<1x16x16xf32>
    %67 = arith.subf %63, %66 : vector<1x16x16xf32>
    %68 = math.exp %67 : vector<1x16x16xf32>
    %cst_28 = arith.constant dense<0.000000e+00> : vector<1x16xf32>
    %69 = vector.multi_reduction <add>, %68, %cst_28 [2] : vector<1x16x16xf32> to vector<1x16xf32>
    %70 = vector.shape_cast %69 : vector<1x16xf32> to vector<1x16x1xf32>
    %71 = vector.broadcast %70 : vector<1x16x1xf32> to vector<1x16x16xf32>
    %72 = arith.divf %68, %71 : vector<1x16x16xf32>
    "tpu.trace_start"() <{level = 10 : i32, message = "bqk,bkd->bqd"}> : () -> ()
    %cst_29 = arith.constant dense<0.000000e+00> : vector<1x16x8xf32>
    %73 = tpu.matmul %72, %58, %cst_29 {dimension_numbers = #tpu.dot_dimension_numbers<[2], [1], [1], [2], [0, 0, 0, 1, 1, 2], [0], [0]>} : vector<1x16x16xf32>, vector<1x16x8xf32>, vector<1x16x8xf32> -> vector<1x16x8xf32>
    "tpu.trace_stop"() : () -> ()
    %74 = vector.shape_cast %73 : vector<1x16x8xf32> to vector<16x8xf32>
    %c2 = arith.constant 2 : index
    %c0_30 = arith.constant 0 : index
    %c0_31 = arith.constant 0 : index
    %75 = vector.load %arg3[%c2, %c0_30, %c0_31] : memref<4x8x32xf32, #tpu.memory_space<vmem>>, vector<1x8x32xf32>
    %76 = vector.shape_cast %75 : vector<1x8x32xf32> to vector<8x32xf32>
    %cst_32 = arith.constant dense<0.000000e+00> : vector<16x32xf32>
    %77 = tpu.matmul %74, %76, %cst_32 {dimension_numbers = #tpu.dot_dimension_numbers<[1], [0], [0], [1], [0, 0, 1, 1], [], []>} : vector<16x8xf32>, vector<8x32xf32>, vector<16x32xf32> -> vector<16x32xf32>
    %78 = arith.addf %55, %77 : vector<16x32xf32>
    %79 = vector.extract_strided_slice %4 {offsets = [0, 0, 24], sizes = [1, 16, 8], strides = [1, 1, 1]} : vector<1x16x96xf32> to vector<1x16x8xf32>
    %80 = vector.extract_strided_slice %4 {offsets = [0, 0, 56], sizes = [1, 16, 8], strides = [1, 1, 1]} : vector<1x16x96xf32> to vector<1x16x8xf32>
    %81 = vector.extract_strided_slice %4 {offsets = [0, 0, 88], sizes = [1, 16, 8], strides = [1, 1, 1]} : vector<1x16x96xf32> to vector<1x16x8xf32>
    "tpu.trace_start"() <{level = 10 : i32, message = "bqd,bkd->bqk"}> : () -> ()
    %cst_33 = arith.constant dense<0.000000e+00> : vector<1x16x16xf32>
    %82 = tpu.matmul %79, %80, %cst_33 {dimension_numbers = #tpu.dot_dimension_numbers<[2], [2], [1], [1], [0, 0, 0, 1, 1, 1], [0], [0]>} : vector<1x16x8xf32>, vector<1x16x8xf32>, vector<1x16x16xf32> -> vector<1x16x16xf32>
    "tpu.trace_stop"() : () -> ()
    %cst_34 = arith.constant 0.353553385 : f32
    %83 = vector.broadcast %cst_34 : f32 to vector<1x16x16xf32>
    %84 = arith.mulf %82, %83 : vector<1x16x16xf32>
    %cst_35 = arith.constant -1.000000e+30 : f32
    %85 = vector.broadcast %cst_35 : f32 to vector<1x16x16xf32>
    %86 = arith.select %8, %84, %85 : vector<1x16x16xi1>, vector<1x16x16xf32>
    %cst_36 = arith.constant dense<0xFF800000> : vector<1x16xf32>
    %87 = vector.multi_reduction <maximumf>, %86, %cst_36 [2] : vector<1x16x16xf32> to vector<1x16xf32>
    %88 = vector.shape_cast %87 : vector<1x16xf32> to vector<1x16x1xf32>
    %89 = vector.broadcast %88 : vector<1x16x1xf32> to vector<1x16x16xf32>
    %90 = arith.subf %86, %89 : vector<1x16x16xf32>
    %91 = math.exp %90 : vector<1x16x16xf32>
    %cst_37 = arith.constant dense<0.000000e+00> : vector<1x16xf32>
    %92 = vector.multi_reduction <add>, %91, %cst_37 [2] : vector<1x16x16xf32> to vector<1x16xf32>
    %93 = vector.shape_cast %92 : vector<1x16xf32> to vector<1x16x1xf32>
    %94 = vector.broadcast %93 : vector<1x16x1xf32> to vector<1x16x16xf32>
    %95 = arith.divf %91, %94 : vector<1x16x16xf32>
    "tpu.trace_start"() <{level = 10 : i32, message = "bqk,bkd->bqd"}> : () -> ()
    %cst_38 = arith.constant dense<0.000000e+00> : vector<1x16x8xf32>
    %96 = tpu.matmul %95, %81, %cst_38 {dimension_numbers = #tpu.dot_dimension_numbers<[2], [1], [1], [2], [0, 0, 0, 1, 1, 2], [0], [0]>} : vector<1x16x16xf32>, vector<1x16x8xf32>, vector<1x16x8xf32> -> vector<1x16x8xf32>
    "tpu.trace_stop"() : () -> ()
    %97 = vector.shape_cast %96 : vector<1x16x8xf32> to vector<16x8xf32>
    %c3 = arith.constant 3 : index
    %c0_39 = arith.constant 0 : index
    %c0_40 = arith.constant 0 : index
    %98 = vector.load %arg3[%c3, %c0_39, %c0_40] : memref<4x8x32xf32, #tpu.memory_space<vmem>>, vector<1x8x32xf32>
    %99 = vector.shape_cast %98 : vector<1x8x32xf32> to vector<8x32xf32>
    %cst_41 = arith.constant dense<0.000000e+00> : vector<16x32xf32>
    %100 = tpu.matmul %97, %99, %cst_41 {dimension_numbers = #tpu.dot_dimension_numbers<[1], [0], [0], [1], [0, 0, 1, 1], [], []>} : vector<16x8xf32>, vector<8x32xf32>, vector<16x32xf32> -> vector<16x32xf32>
    %101 = arith.addf %78, %100 : vector<16x32xf32>
    %102 = vector.shape_cast %101 : vector<16x32xf32> to vector<1x16x32xf32>
    %c0_42 = arith.constant 0 : index
    %c0_43 = arith.constant 0 : index
    %c0_44 = arith.constant 0 : index
    %103 = vector.load %arg4[%c0_42, %c0_43, %c0_44] : memref<1x16x32xf32, #tpu.memory_space<vmem>>, vector<1x16x32xf32>
    tpu.vector_store %arg4[%c0_42, %c0_43, %c0_44], %102 {strides = array<i32>} : memref<1x16x32xf32, #tpu.memory_space<vmem>>, vector<1x16x32xf32>,
    return
  }
  func.func @transform_0(%arg0: i32) -> (i32, i32, i32) {
    %c0_i32 = arith.constant 0 : i32
    %c0_i32_0 = arith.constant 0 : i32
    %c0_i32_1 = arith.constant 0 : i32
    return %arg0, %c0_i32, %c0_i32_0 : i32, i32, i32
  }
  func.func @transform_1(%arg0: i32) -> (i32, i32) {
    %c0_i32 = arith.constant 0 : i32
    %c0_i32_0 = arith.constant 0 : i32
    %c0_i32_1 = arith.constant 0 : i32
    return %c0_i32, %c0_i32_0 : i32, i32
  }
  func.func @transform_2(%arg0: i32) -> (i32, i32, i32) {
    %c0_i32 = arith.constant 0 : i32
    %c0_i32_0 = arith.constant 0 : i32
    %c0_i32_1 = arith.constant 0 : i32
    %c0_i32_2 = arith.constant 0 : i32
    return %c0_i32, %c0_i32_0, %c0_i32_1 : i32, i32, i32
  }
  func.func @transform_3(%arg0: i32) -> (i32, i32, i32) {
    %c0_i32 = arith.constant 0 : i32
    %c0_i32_0 = arith.constant 0 : i32
    %c0_i32_1 = arith.constant 0 : i32
    return %arg0, %c0_i32, %c0_i32_0 : i32, i32, i32
  }
}

</mosaic_0001>

<llo_original>
// kernel: tpu_custom_call.1
$region0: #{tpu_custom_call.1}
  #allocation0 [shape = 'u32[]', space=smem, size = 0x4, offset = 0x4, fixed_abs, tag = 'smem constant byte address 0x4 - core index']
  #allocation1 [shape = 'u32[144,128]{1,0:T(1,128)}', space=vmem, size = 0x12000, scoped, tag = 'internal scratch']
  %s0 = inlined_call_operand.hbm [shape: f32[2,16,32], index: 0, kind: input, shape index: {}]
  %s1 = inlined_call_operand.hbm [shape: f32[32,96], index: 1, kind: input, shape index: {}]
  %s2 = inlined_call_operand.hbm [shape: f32[4,8,32], index: 2, kind: input, shape index: {}]
  %s3 = inlined_call_operand.hbm [shape: f32[2,16,32], index: 3, kind: output, shape index: {}]
  %s4 = sld [smem:[#allocation0]]
  $region57: #{tpu_custom_call.1} parent=0
    _
  %s6 = ssub.s32 1, %s4
  %s7 = scalar_select 0, %s6, %s4
  $region1: #{tpu_custom_call.1} parent=0
    #allocation2 [shape = 'u8[16384]{0}', space=vmem, size = 0x4000, scoped, tag = 'input window, operand 0']
    #allocation3 [shape = 's32[2]{0}', space=sflag, size = 0x8, scoped, tag = 'scoped memory for tpu_custom_call.1']
    #allocation4 [shape = 's32[2]{0}', space=sflag, size = 0x8, scoped, tag = 'scoped memory for tpu_custom_call.1']
    #allocation5 [shape = 'u8[16384]{0}', space=vmem, size = 0x4000, scoped, tag = 'input window, operand 1, single buffered']
    #allocation6 [shape = 's32[1]{0}', space=sflag, size = 0x4, scoped, tag = 'scoped memory for tpu_custom_call.1']
    #allocation7 [shape = 'u8[16384]{0}', space=vmem, size = 0x4000, scoped, tag = 'input window, operand 2, single buffered']
    #allocation8 [shape = 'u8[16384]{0}', space=vmem, size = 0x4000, scoped, tag = 'output window, operand 0']
    %8 = vsyncpa [#allocation3], 0
    %s9 = scalar_lea.sflag [#allocation3], 1
    %10 = vsyncpa %s9, 0
    %11 = vsyncpa [#allocation6], 0
    %12 = vsyncpa [#allocation4], 0
    %s13 = scalar_lea.sflag [#allocation4], 1
    %14 = vsyncpa %s13, 0
    loop: start=0, step=1, limit=4
    $region2: #{tpu_custom_call.1} parent=1 // loop_pre_header
      _
    $region3: #{tpu_custom_call.1} parent=1 // loop_header
      %s16 = sphi 0, %s20
      %p17 = scmp.ge.s32.totalorder %s16, 4
      %s26 = sphi 0, %s28
      %s29 = sphi 0, %s26
      %s30 = sphi 0, %s29
      %s46 = sphi 0, %s30
      %s50 = sphi 0, %s50
      %s52 = sphi 0, %s50
      %s53 = sphi 0, %s52
      %s67 = sphi 0, %s53
      %s71 = sphi 0, %s71
      %s73 = sphi 0, %s71
      %s74 = sphi 0, %s73
      %s88 = sphi 0, %s74
      %s94 = sphi 0, %s96
      %s97 = sphi 0, %s94
      %s98 = sphi 0, %s97
      %s114 = sphi 0, %s98
    $region4: #{tpu_custom_call.1} parent=1 // loop_header_branch
      %19 = sbr.rel (%p17) target = $region8
    $region5: #{tpu_custom_call.1} parent=1 // loop_body
      %s21 = ssub.s32 %s16, 1
      %s22 = ssub.s32 %s16, 2
      %s23 = sadd.s32 %s16, 1
      %s24 = ssub.s32 %s16, %s23
      %p25 = scmp.eq.s32.totalorder %s24, 0
      %s27 = sadd.s32 %s26, 1
      %s28 = scalar_select %p25, %s26, %s27
      %p31 = pneg %p25
      %p32 = scmp.eq.s32.totalorder %s16, 1
      %p33 = por %p31, %p32
      %p34 = scmp.ne.s32.totalorder %s26, %s29
      %p35 = scmp.eq.s32.totalorder %s16, 0
      %p36 = por %p34, %p35
      %p37 = scmp.ne.s32.totalorder %s26, %s29
      %p38 = scmp.eq.s32.totalorder %s21, 1
      %p39 = por %p37, %p38
      %p40 = scmp.ne.s32.totalorder %s29, %s30
      %p41 = scmp.eq.s32.totalorder %s21, 0
      %p42 = por %p40, %p41
      %p43 = scmp.ne.s32.totalorder %s29, %s30
      %p44 = scmp.eq.s32.totalorder %s22, 1
      %p45 = por %p43, %p44
      %p47 = scmp.ne.s32.totalorder %s30, %s46
      %p48 = scmp.eq.s32.totalorder %s22, 0
      %p49 = por %p47, %p48
      %s51 = sadd.s32 %s50, 1
      %p54 = scmp.eq.s32.totalorder %s16, 1
      %p55 = scmp.ne.s32.totalorder %s50, %s52
      %p56 = scmp.eq.s32.totalorder %s16, 0
      %p57 = por %p55, %p56
      %p58 = scmp.ne.s32.totalorder %s50, %s52
      %p59 = scmp.eq.s32.totalorder %s21, 1
      %p60 = por %p58, %p59
      %p61 = scmp.ne.s32.totalorder %s52, %s53
      %p62 = scmp.eq.s32.totalorder %s21, 0
      %p63 = por %p61, %p62
      %p64 = scmp.ne.s32.totalorder %s52, %s53
      %p65 = scmp.eq.s32.totalorder %s22, 1
      %p66 = por %p64, %p65
      %p68 = scmp.ne.s32.totalorder %s53, %s67
      %p69 = scmp.eq.s32.totalorder %s22, 0
      %p70 = por %p68, %p69
      %s72 = sadd.s32 %s71, 1
      %p75 = scmp.eq.s32.totalorder %s16, 1
      %p76 = scmp.ne.s32.totalorder %s71, %s73
      %p77 = scmp.eq.s32.totalorder %s16, 0
      %p78 = por %p76, %p77
      %p79 = scmp.ne.s32.totalorder %s71, %s73
      %p80 = scmp.eq.s32.totalorder %s21, 1
      %p81 = por %p79, %p80
      %p82 = scmp.ne.s32.totalorder %s73, %s74
      %p83 = scmp.eq.s32.totalorder %s21, 0
      %p84 = por %p82, %p83
      %p85 = scmp.ne.s32.totalorder %s73, %s74
      %p86 = scmp.eq.s32.totalorder %s22, 1
      %p87 = por %p85, %p86
      %p89 = scmp.ne.s32.totalorder %s74, %s88
      %p90 = scmp.eq.s32.totalorder %s22, 0
      %p91 = por %p89, %p90
      %s92 = ssub.s32 %s16, %s23
      %p93 = scmp.eq.s32.totalorder %s92, 0
      %s95 = sadd.s32 %s94, 1
      %s96 = scalar_select %p93, %s94, %s95
      %p99 = pneg %p93
      %p100 = scmp.eq.s32.totalorder %s16, 1
      %p101 = por %p99, %p100
      %p102 = scmp.ne.s32.totalorder %s94, %s97
      %p103 = scmp.eq.s32.totalorder %s16, 0
      %p104 = por %p102, %p103
      %p105 = scmp.ne.s32.totalorder %s94, %s97
      %p106 = scmp.eq.s32.totalorder %s21, 1
      %p107 = por %p105, %p106
      %p108 = scmp.ne.s32.totalorder %s97, %s98
      %p109 = scmp.eq.s32.totalorder %s21, 0
      %p110 = por %p108, %p109
      %p111 = scmp.ne.s32.totalorder %s97, %s98
      %p112 = scmp.eq.s32.totalorder %s22, 1
      %p113 = por %p111, %p112
      %p115 = scmp.ne.s32.totalorder %s98, %s114
      %p116 = scmp.eq.s32.totalorder %s22, 0
      %p117 = por %p115, %p116
      %p118 = scmp.le.s32.totalorder 1, %s16
      %p119 = scmp.lt.s32.totalorder %s16, 3
      %p120 = pnand %p118, %p119
      %p121 = pneg %p120
      // Predicated region
      $region9: #{tpu_custom_call.1} parent=5 // pred_check
        _
      $region10: #{tpu_custom_call.1} parent=5 // pred_check_branch
        %123 = sbr.rel (%p120) target = $region12
      $region11: #{tpu_custom_call.1} parent=5 // pred_region
        %s124 = ssub.s32 %s16, 1
        // Predicated region
        $region13: #{tpu_custom_call.1} parent=11 // pred_check
          %p125 = pneg %p63
        $region14: #{tpu_custom_call.1} parent=11 // pred_check_branch
          %127 = sbr.rel (%p125) target = $region16
        $region15: #{tpu_custom_call.1} parent=11 // pred_region
          %s129 = ssub.s32 512, 512
          %130 = vsyncadd [#allocation6], %s129
          %s131 = sshll.u32 [#allocation5], 4
          %s132 = int_to_ptr.vmem [resolvable:$true] %s131
          %137 = dma.hbm_to_vmem [thread:$0]  %s1, 512, %s132, [#allocation6], 128, 128, 8
        $region16: #{tpu_custom_call.1} parent=11 // pred_fallthru
          _
        // Predicated region
        $region17: #{tpu_custom_call.1} parent=11 // pred_check
          %p138 = pneg %p84
        $region18: #{tpu_custom_call.1} parent=11 // pred_check_branch
          %140 = sbr.rel (%p138) target = $region20
        $region19: #{tpu_custom_call.1} parent=11 // pred_region
          %s142 = ssub.s32 512, 512
          %143 = vsyncadd [#allocation6], %s142
          %s144 = sshll.u32 [#allocation7], 4
          %s145 = int_to_ptr.vmem [resolvable:$true] %s144
          %150 = dma.hbm_to_vmem [thread:$0]  %s2, 512, %s145, [#allocation6], 128, 128, 8
        $region20: #{tpu_custom_call.1} parent=11 // pred_fallthru
          _
      $region12: #{tpu_custom_call.1} parent=5 // pred_fallthru
        _
      %p151 = scmp.lt.s32.totalorder %s16, 2
      // Predicated region
      $region21: #{tpu_custom_call.1} parent=5 // pred_check
        %p152 = pneg %p151
      $region22: #{tpu_custom_call.1} parent=5 // pred_check_branch
        %154 = sbr.rel (%p152) target = $region24
      $region23: #{tpu_custom_call.1} parent=5 // pred_region
        // Predicated region
        $region25: #{tpu_custom_call.1} parent=23 // pred_check
          %p155 = pneg %p36
        $region26: #{tpu_custom_call.1} parent=23 // pred_check_branch
          %157 = sbr.rel (%p155) target = $region28
        $region27: #{tpu_custom_call.1} parent=23 // pred_region
          %s158 = sand.u32 %s26, 1
          %s159 = scalar_lea.sflag [#allocation3], %s158
          %s160 = sand.u32 %s26, 1
          %s161 = smul.addr %s160, 16
          %s162 = scalar_lea.vmem [#allocation2], %s161
          %s164 = ssub.s32 256, 256
          %165 = vsyncadd %s159, %s164
          %s166 = smul.addr %s16, 2
          %s167 = smul.addr %s166, 128
          %s168 = scalar_lea.hbm %s0, %s167
          %s169 = sshll.u32 %s162, 4
          %s170 = int_to_ptr.vmem [resolvable:$true] %s169
          %175 = dma.hbm_to_vmem [thread:$0]  %s168, 256, %s170, %s159, 128, 128, 8
        $region28: #{tpu_custom_call.1} parent=23 // pred_fallthru
          _
      $region24: #{tpu_custom_call.1} parent=5 // pred_fallthru
        _
      %p176 = scmp.le.s32.totalorder 1, %s16
      %p177 = scmp.lt.s32.totalorder %s16, 3
      %p178 = pnand %p176, %p177
      %p179 = pneg %p178
      // Predicated region
      $region29: #{tpu_custom_call.1} parent=5 // pred_check
        _
      $region30: #{tpu_custom_call.1} parent=5 // pred_check_branch
        %181 = sbr.rel (%p178) target = $region32
      $region31: #{tpu_custom_call.1} parent=5 // pred_region
        %s182 = ssub.s32 %s16, 1
        %s183 = sand.u32 %s29, 1
        %s184 = scalar_lea.sflag [#allocation3], %s183
        %s185 = sand.u32 %s29, 1
        %s186 = smul.addr %s185, 16
        %s187 = scalar_lea.vmem [#allocation2], %s186
        // Predicated region
        $region33: #{tpu_custom_call.1} parent=31 // pred_check
          %p188 = pneg %p42
        $region34: #{tpu_custom_call.1} parent=31 // pred_check_branch
          %190 = sbr.rel (%p188) target = $region36
        $region35: #{tpu_custom_call.1} parent=31 // pred_region
          %191 = dma.done %s184, 256
        $region36: #{tpu_custom_call.1} parent=31 // pred_fallthru
          _
        // Predicated region
        $region37: #{tpu_custom_call.1} parent=31 // pred_check
          %p192 = pneg %p63
        $region38: #{tpu_custom_call.1} parent=31 // pred_check_branch
          %194 = sbr.rel (%p192) target = $region40
        $region39: #{tpu_custom_call.1} parent=31 // pred_region
          %195 = dma.done [#allocation6], 512
        $region40: #{tpu_custom_call.1} parent=31 // pred_fallthru
          _
        // Predicated region
        $region41: #{tpu_custom_call.1} parent=31 // pred_check
          %p196 = pneg %p84
        $region42: #{tpu_custom_call.1} parent=31 // pred_check_branch
          %198 = sbr.rel (%p196) target = $region44
        $region43: #{tpu_custom_call.1} parent=31 // pred_region
          %199 = dma.done [#allocation6], 512
        $region44: #{tpu_custom_call.1} parent=31 // pred_fallthru
          _
        %s200 = sand.u32 %s29, 1
        %s201 = scalar_lea.sflag [#allocation3], %s200
        %s202 = sand.u32 %s29, 1
        %s203 = smul.addr %s202, 16
        %s204 = scalar_lea.vmem [#allocation2], %s203
        %p205 = pneg %p42
        %p206 = pneg %p39
        %p207 = pneg %p63
        %p208 = pneg %p60
        %p209 = pneg %p84
        %p210 = pneg %p81
        %p211 = pneg %p110
        %p212 = pneg %p107
        %s213 = sand.u32 %s97, 1
        %s214 = scalar_lea.sflag [#allocation4], %s213
        %s215 = sand.u32 %s97, 1
        %s216 = smul.addr %s215, 16
        %s217 = scalar_lea.vmem [#allocation8], %s216
        %v218 = vld [vmem:[%s187] sm:$0xff]
        %v219 = vld [vmem:[%s187 + $0x8] sm:$0xff]
        %v220 = vld [vmem:[#allocation5] sm:$0xff]
        %v221 = vld [vmem:[#allocation5 + $0x8] sm:$0xff]
        %v222 = vld [vmem:[#allocation5 + $0x10] sm:$0xff]
        %v223 = vld [vmem:[#allocation5 + $0x18] sm:$0xff]
        %vm224 = vcmask 261120
        %v226 = vsel %vm224, %v218, 0
        %v229 = vsel %vm224, %v219, 0
        %231 = vmatprep.subr.mxu0 0.0
        %232 = vmatpush1.msra.mxu0 0.0
        %233 = vmatprep.subr.mxu0 0.0
        %234 = vmatpush1.msra.mxu0 0.0
        %235 = vmatprep.subr.mxu0 0.0
        %236 = vmatpush1.msra.mxu0 0.0
        %237 = vmatprep.subr.mxu0 0.0
        %238 = vmatpush1.msra.mxu0 0.0
        %239 = vmatprep.subr.mxu0 0.0
        %240 = vmatpush1.msra.mxu0 0.0
        %241 = vmatprep.subr.mxu0 0.0
        %242 = vmatpush1.msra.mxu0 0.0
        %243 = vmatprep.subr.mxu0 0.0
        %244 = vmatpush1.msra.mxu0 0.0
        %245 = vmatprep.subr.mxu0 0.0
        %246 = vmatpush1.msra.mxu0 0.0
        %247 = vmatprep.subr.mxu0 0.0
        %248 = vmatpush1.msra.mxu0 0.0
        %249 = vmatprep.subr.mxu0 0.0
        %250 = vmatpush1.msra.mxu0 0.0
        %251 = vmatprep.subr.mxu0 0.0
        %252 = vmatpush1.msra.mxu0 0.0
        %253 = vmatprep.subr.mxu0 0.0
        %254 = vmatpush1.msra.mxu0 0.0
        %255 = vmatprep.subr.mxu0 0.0
        %256 = vmatpush1.msra.mxu0 %v223
        %257 = vmatprep.subr.mxu0 0.0
        %258 = vmatpush1.msra.mxu0 %v222
        %259 = vmatprep.subr.mxu0 0.0
        %260 = vmatpush1.msra.mxu0 %v221
        %261 = vmatprep.subr.mxu0 0.0
        %262 = vmatpush1.msra.mxu0 %v220
        %263 = vmatprep.subr.mxu0 0.0
        %264 = vmatpush2.msra.mxu0 0.0
        %265 = vmatprep.subr.mxu0 0.0
        %266 = vmatpush2.msra.mxu0 0.0
        %267 = vmatprep.subr.mxu0 0.0
        %268 = vmatpush2.msra.mxu0 0.0
        %269 = vmatprep.subr.mxu0 0.0
        %270 = vmatpush2.msra.mxu0 0.0
        %271 = vmatprep.subr.mxu0 0.0
        %272 = vmatpush2.msra.mxu0 0.0
        %273 = vmatprep.subr.mxu0 0.0
        %274 = vmatpush2.msra.mxu0 0.0
        %275 = vmatprep.subr.mxu0 0.0
        %276 = vmatpush2.msra.mxu0 0.0
        %277 = vmatprep.subr.mxu0 0.0
        %278 = vmatpush2.msra.mxu0 0.0
        %279 = vmatprep.subr.mxu0 0.0
        %280 = vmatpush2.msra.mxu0 0.0
        %281 = vmatprep.subr.mxu0 0.0
        %282 = vmatpush2.msra.mxu0 0.0
        %283 = vmatprep.subr.mxu0 0.0
        %284 = vmatpush2.msra.mxu0 0.0
        %285 = vmatprep.subr.mxu0 0.0
        %286 = vmatpush2.msra.mxu0 0.0
        %287 = vmatprep.subr.mxu0 0.0
        %288 = vmatpush2.msra.mxu0 0.0
        %289 = vmatprep.subr.mxu0 0.0
        %290 = vmatpush2.msra.mxu0 0.0
        %291 = vmatprep.subr.mxu0 0.0
        %292 = vmatpush2.msra.mxu0 0.0
        %293 = vmatprep.subr.mxu0 0.0
        %294 = vmatpush2.msra.mxu0 0.0
        %295 = vmatprep.mubr.f32.mxu0 0.0
        %296 = vmatmul.mubr.f32.gmra.mxu0 %v226
        %v297 = vpop.f32.mrf.mxu0
        %v298 = vadd.f32 0.0, %v297
        %v299 = vpop.f32.mrf.mxu0
        %300 = vmatprep.mubr.f32.mxu0 0.0
        %301 = vmatmul.mubr.f32.gmra.mxu0 %v229
        %v302 = vpop.f32.mrf.mxu0
        %v303 = vadd.f32 0.0, %v302
        %v304 = vpop.f32.mrf.mxu0
        %305 = vdwg.mxu0
        %v306 = vlaneseq
        %v307 = vshrl.u32 %v306, 7
        %v308 = vadd.s32 %v307, 8
        %v309 = vlaneseq
        %v310 = vand.u32 %v309, 127
        %vm311 = vcmp.ge.s32.totalorder %v307, %v310
        %vm312 = vcmp.ge.s32.totalorder %v308, %v310
        %315 = vrot.lane.b32.xlu0 %v298, 96
        %v316 = vpop.permute.xlu0 %315
        %317 = vrot.lane.b32.xlu0 %v303, 96
        %v318 = vpop.permute.xlu0 %317
        %vm319 = vcmask 64512
        %v320 = vsel %vm319, %v298, 0
        %v322 = vsel %vm319, %v303, 0
        %v324 = vsel %vm319, %v316, 0
        %v326 = vsel %vm319, %v318, 0
        %328 = vmatprep.subr.mxu0 0.0
        %329 = vmatpush1.xpose.msra.mxu0 0.0
        %330 = vmatprep.subr.mxu0 0.0
        %331 = vmatpush1.xpose.msra.mxu0 0.0
        %332 = vmatprep.subr.mxu0 0.0
        %333 = vmatpush1.xpose.msra.mxu0 0.0
        %334 = vmatprep.subr.mxu0 0.0
        %335 = vmatpush1.xpose.msra.mxu0 0.0
        %336 = vmatprep.subr.mxu0 0.0
        %337 = vmatpush1.xpose.msra.mxu0 0.0
        %338 = vmatprep.subr.mxu0 0.0
        %339 = vmatpush1.xpose.msra.mxu0 0.0
        %340 = vmatprep.subr.mxu0 0.0
        %341 = vmatpush1.xpose.msra.mxu0 0.0
        %342 = vmatprep.subr.mxu0 0.0
        %343 = vmatpush1.xpose.msra.mxu0 0.0
        %344 = vmatprep.subr.mxu0 0.0
        %345 = vmatpush1.xpose.msra.mxu0 0.0
        %346 = vmatprep.subr.mxu0 0.0
        %347 = vmatpush1.xpose.msra.mxu0 0.0
        %348 = vmatprep.subr.mxu0 0.0
        %349 = vmatpush1.xpose.msra.mxu0 0.0
        %350 = vmatprep.subr.mxu0 0.0
        %351 = vmatpush1.xpose.msra.mxu0 0.0
        %352 = vmatprep.subr.mxu0 0.0
        %353 = vmatpush1.xpose.msra.mxu0 0.0
        %354 = vmatprep.subr.mxu0 0.0
        %355 = vmatpush1.xpose.msra.mxu0 0.0
        %356 = vmatprep.subr.mxu0 0.0
        %357 = vmatpush1.xpose.msra.mxu0 %v326
        %358 = vmatprep.subr.mxu0 0.0
        %359 = vmatpush1.xpose.msra.mxu0 %v324
        %360 = vmatprep.subr.mxu0 0.0
        %361 = vmatpush2.xpose.msra.mxu0 0.0
        %362 = vmatprep.subr.mxu0 0.0
        %363 = vmatpush2.xpose.msra.mxu0 0.0
        %364 = vmatprep.subr.mxu0 0.0
        %365 = vmatpush2.xpose.msra.mxu0 0.0
        %366 = vmatprep.subr.mxu0 0.0
        %367 = vmatpush2.xpose.msra.mxu0 0.0
        %368 = vmatprep.subr.mxu0 0.0
        %369 = vmatpush2.xpose.msra.mxu0 0.0
        %370 = vmatprep.subr.mxu0 0.0
        %371 = vmatpush2.xpose.msra.mxu0 0.0
        %372 = vmatprep.subr.mxu0 0.0
        %373 = vmatpush2.xpose.msra.mxu0 0.0
        %374 = vmatprep.subr.mxu0 0.0
        %375 = vmatpush2.xpose.msra.mxu0 0.0
        %376 = vmatprep.subr.mxu0 0.0
        %377 = vmatpush2.xpose.msra.mxu0 0.0
        %378 = vmatprep.subr.mxu0 0.0
        %379 = vmatpush2.xpose.msra.mxu0 0.0
        %380 = vmatprep.subr.mxu0 0.0
        %381 = vmatpush2.xpose.msra.mxu0 0.0
        %382 = vmatprep.subr.mxu0 0.0
        %383 = vmatpush2.xpose.msra.mxu0 0.0
        %384 = vmatprep.subr.mxu0 0.0
        %385 = vmatpush2.xpose.msra.mxu0 0.0
        %386 = vmatprep.subr.mxu0 0.0
        %387 = vmatpush2.xpose.msra.mxu0 0.0
        %388 = vmatprep.subr.mxu0 0.0
        %389 = vmatpush2.xpose.msra.mxu0 0.0
        %390 = vmatprep.subr.mxu0 0.0
        %391 = vmatpush2.xpose.msra.mxu0 0.0
        %392 = vmatprep.mubr.f32.mxu0 0.0
        %393 = vmatmul.mubr.f32.gmra.mxu0 %v320
        %v394 = vpop.f32.mrf.mxu0
        %v395 = vadd.f32 0.0, %v394
        %v396 = vpop.f32.mrf.mxu0
        %397 = vmatprep.mubr.f32.mxu0 0.0
        %398 = vmatmul.mubr.f32.gmra.mxu0 %v322
        %v399 = vpop.f32.mrf.mxu0
        %v400 = vadd.f32 0.0, %v399
        %v401 = vpop.f32.mrf.mxu0
        %402 = vdwg.mxu0
        %v403 = vmul.f32 %v395, 0.35355338
        %v404 = vmul.f32 %v400, 0.35355338
        %v405 = vsel %vm311, %v403, -1e+30
        %v406 = vsel %vm312, %v404, -1e+30
        %vm407 = vcmask 130048
        %v408 = vsel %vm407, %v405, -inf
        %409 = vmax.xlane.f32.xlu0 %v408
        %v410 = vpop.xlane.xlu0 %409
        %v411 = vsel %vm407, %v406, -inf
        %412 = vmax.xlane.f32.xlu0 %v411
        %v413 = vpop.xlane.xlu0 %412
        %v414 = vsub.f32 %v405, %v410
        %v415 = vsub.f32 %v406, %v413
        %v416 = vmul.f32 %v414, 1.442695
        %v417 = vpow.pop %v416
        %v418 = vmul.f32 %v415, 1.442695
        %v419 = vpow.pop %v418
        %v420 = vsel %vm407, %v417, 0.0
        %421 = vadd.xlane.f32.xlu0 %v420
        %v422 = vpop.xlane.xlu0 %421
        %v423 = vsel %vm407, %v419, 0.0
        %424 = vadd.xlane.f32.xlu0 %v423
        %v425 = vpop.xlane.xlu0 %424
        %v426 = vrcp.pop %v422
        %v427 = vmul.f32 %v417, %v426
        %v428 = vrcp.pop %v425
        %v429 = vmul.f32 %v419, %v428
        %430 = vrot.lane.b32.xlu0 %v298, 64
        %v431 = vpop.permute.xlu0 %430
        %432 = vrot.lane.b32.xlu0 %v303, 64
        %v433 = vpop.permute.xlu0 %432
        %v437 = vsel %vm407, %v427, 0
        %v440 = vsel %vm407, %v429, 0
        %442 = vmatprep.subr.mxu0 0.0
        %443 = vmatpush1.msra.mxu0 0.0
        %444 = vmatprep.subr.mxu0 0.0
        %445 = vmatpush1.msra.mxu0 0.0
        %446 = vmatprep.subr.mxu0 0.0
        %447 = vmatpush1.msra.mxu0 0.0
        %448 = vmatprep.subr.mxu0 0.0
        %449 = vmatpush1.msra.mxu0 0.0
        %450 = vmatprep.subr.mxu0 0.0
        %451 = vmatpush1.msra.mxu0 0.0
        %452 = vmatprep.subr.mxu0 0.0
        %453 = vmatpush1.msra.mxu0 0.0
        %454 = vmatprep.subr.mxu0 0.0
        %455 = vmatpush1.msra.mxu0 0.0
        %456 = vmatprep.subr.mxu0 0.0
        %457 = vmatpush1.msra.mxu0 0.0
        %458 = vmatprep.subr.mxu0 0.0
        %459 = vmatpush1.msra.mxu0 0.0
        %460 = vmatprep.subr.mxu0 0.0
        %461 = vmatpush1.msra.mxu0 0.0
        %462 = vmatprep.subr.mxu0 0.0
        %463 = vmatpush1.msra.mxu0 0.0
        %464 = vmatprep.subr.mxu0 0.0
        %465 = vmatpush1.msra.mxu0 0.0
        %466 = vmatprep.subr.mxu0 0.0
        %467 = vmatpush1.msra.mxu0 0.0
        %468 = vmatprep.subr.mxu0 0.0
        %469 = vmatpush1.msra.mxu0 0.0
        %470 = vmatprep.subr.mxu0 0.0
        %471 = vmatpush1.msra.mxu0 %v433
        %472 = vmatprep.subr.mxu0 0.0
        %473 = vmatpush1.msra.mxu0 %v431
        %474 = vmatprep.subr.mxu0 0.0
        %475 = vmatpush2.msra.mxu0 0.0
        %476 = vmatprep.subr.mxu0 0.0
        %477 = vmatpush2.msra.mxu0 0.0
        %478 = vmatprep.subr.mxu0 0.0
        %479 = vmatpush2.msra.mxu0 0.0
        %480 = vmatprep.subr.mxu0 0.0
        %481 = vmatpush2.msra.mxu0 0.0
        %482 = vmatprep.subr.mxu0 0.0
        %483 = vmatpush2.msra.mxu0 0.0
        %484 = vmatprep.subr.mxu0 0.0
        %485 = vmatpush2.msra.mxu0 0.0
        %486 = vmatprep.subr.mxu0 0.0
        %487 = vmatpush2.msra.mxu0 0.0
        %488 = vmatprep.subr.mxu0 0.0
        %489 = vmatpush2.msra.mxu0 0.0
        %490 = vmatprep.subr.mxu0 0.0
        %491 = vmatpush2.msra.mxu0 0.0
        %492 = vmatprep.subr.mxu0 0.0
        %493 = vmatpush2.msra.mxu0 0.0
        %494 = vmatprep.subr.mxu0 0.0
        %495 = vmatpush2.msra.mxu0 0.0
        %496 = vmatprep.subr.mxu0 0.0
        %497 = vmatpush2.msra.mxu0 0.0
        %498 = vmatprep.subr.mxu0 0.0
        %499 = vmatpush2.msra.mxu0 0.0
        %500 = vmatprep.subr.mxu0 0.0
        %501 = vmatpush2.msra.mxu0 0.0
        %502 = vmatprep.subr.mxu0 0.0
        %503 = vmatpush2.msra.mxu0 0.0
        %504 = vmatprep.subr.mxu0 0.0
        %505 = vmatpush2.msra.mxu0 0.0
        %506 = vmatprep.mubr.f32.mxu0 0.0
        %507 = vmatmul.mubr.f32.gmra.mxu0 %v437
        %v508 = vpop.f32.mrf.mxu0
        %v509 = vadd.f32 0.0, %v508
        %v510 = vpop.f32.mrf.mxu0
        %511 = vmatprep.mubr.f32.mxu0 0.0
        %512 = vmatmul.mubr.f32.gmra.mxu0 %v440
        %v513 = vpop.f32.mrf.mxu0
        %v514 = vadd.f32 0.0, %v513
        %v515 = vpop.f32.mrf.mxu0
        %516 = vdwg.mxu0
        %v517 = vld [vmem:[#allocation7] sm:$0xff]
        %518 = vrot.lane.b32.xlu0 %v298, 120
        %v519 = vpop.permute.xlu0 %518
        %520 = vrot.lane.b32.xlu0 %v303, 120
        %v521 = vpop.permute.xlu0 %520
        %522 = vrot.lane.b32.xlu0 %v298, 88
        %v523 = vpop.permute.xlu0 %522
        %524 = vrot.lane.b32.xlu0 %v303, 88
        %v525 = vpop.permute.xlu0 %524
        %v526 = vsel %vm319, %v519, 0
        %v528 = vsel %vm319, %v521, 0
        %v530 = vsel %vm319, %v523, 0
        %v532 = vsel %vm319, %v525, 0
        %534 = vmatprep.subr.mxu0 0.0
        %535 = vmatpush1.xpose.msra.mxu0 0.0
        %536 = vmatprep.subr.mxu0 0.0
        %537 = vmatpush1.xpose.msra.mxu0 0.0
        %538 = vmatprep.subr.mxu0 0.0
        %539 = vmatpush1.xpose.msra.mxu0 0.0
        %540 = vmatprep.subr.mxu0 0.0
        %541 = vmatpush1.xpose.msra.mxu0 0.0
        %542 = vmatprep.subr.mxu0 0.0
        %543 = vmatpush1.xpose.msra.mxu0 0.0
        %544 = vmatprep.subr.mxu0 0.0
        %545 = vmatpush1.xpose.msra.mxu0 0.0
        %546 = vmatprep.subr.mxu0 0.0
        %547 = vmatpush1.xpose.msra.mxu0 0.0
        %548 = vmatprep.subr.mxu0 0.0
        %549 = vmatpush1.xpose.msra.mxu0 0.0
        %550 = vmatprep.subr.mxu0 0.0
        %551 = vmatpush1.xpose.msra.mxu0 0.0
        %552 = vmatprep.subr.mxu0 0.0
        %553 = vmatpush1.xpose.msra.mxu0 0.0
        %554 = vmatprep.subr.mxu0 0.0
        %555 = vmatpush1.xpose.msra.mxu0 0.0
        %556 = vmatprep.subr.mxu0 0.0
        %557 = vmatpush1.xpose.msra.mxu0 0.0
        %558 = vmatprep.subr.mxu0 0.0
        %559 = vmatpush1.xpose.msra.mxu0 0.0
        %560 = vmatprep.subr.mxu0 0.0
        %561 = vmatpush1.xpose.msra.mxu0 0.0
        %562 = vmatprep.subr.mxu0 0.0
        %563 = vmatpush1.xpose.msra.mxu0 %v532
        %564 = vmatprep.subr.mxu0 0.0
        %565 = vmatpush1.xpose.msra.mxu0 %v530
        %566 = vmatprep.subr.mxu0 0.0
        %567 = vmatpush2.xpose.msra.mxu0 0.0
        %568 = vmatprep.subr.mxu0 0.0
        %569 = vmatpush2.xpose.msra.mxu0 0.0
        %570 = vmatprep.subr.mxu0 0.0
        %571 = vmatpush2.xpose.msra.mxu0 0.0
        %572 = vmatprep.subr.mxu0 0.0
        %573 = vmatpush2.xpose.msra.mxu0 0.0
        %574 = vmatprep.subr.mxu0 0.0
        %575 = vmatpush2.xpose.msra.mxu0 0.0
        %576 = vmatprep.subr.mxu0 0.0
        %577 = vmatpush2.xpose.msra.mxu0 0.0
        %578 = vmatprep.subr.mxu0 0.0
        %579 = vmatpush2.xpose.msra.mxu0 0.0
        %580 = vmatprep.subr.mxu0 0.0
        %581 = vmatpush2.xpose.msra.mxu0 0.0
        %582 = vmatprep.subr.mxu0 0.0
        %583 = vmatpush2.xpose.msra.mxu0 0.0
        %584 = vmatprep.subr.mxu0 0.0
        %585 = vmatpush2.xpose.msra.mxu0 0.0
        %586 = vmatprep.subr.mxu0 0.0
        %587 = vmatpush2.xpose.msra.mxu0 0.0
        %588 = vmatprep.subr.mxu0 0.0
        %589 = vmatpush2.xpose.msra.mxu0 0.0
        %590 = vmatprep.subr.mxu0 0.0
        %591 = vmatpush2.xpose.msra.mxu0 0.0
        %592 = vmatprep.subr.mxu0 0.0
        %593 = vmatpush2.xpose.msra.mxu0 0.0
        %594 = vmatprep.subr.mxu0 0.0
        %595 = vmatpush2.xpose.msra.mxu0 0.0
        %596 = vmatprep.subr.mxu0 0.0
        %597 = vmatpush2.xpose.msra.mxu0 0.0
        %598 = vmatprep.mubr.f32.mxu0 0.0
        %599 = vmatmul.mubr.f32.gmra.mxu0 %v526
        %v600 = vpop.f32.mrf.mxu0
        %v601 = vadd.f32 0.0, %v600
        %v602 = vpop.f32.mrf.mxu0
        %603 = vmatprep.mubr.f32.mxu0 0.0
        %604 = vmatmul.mubr.f32.gmra.mxu0 %v528
        %v605 = vpop.f32.mrf.mxu0
        %v606 = vadd.f32 0.0, %v605
        %v607 = vpop.f32.mrf.mxu0
        %608 = vdwg.mxu0
        %v609 = vmul.f32 %v601, 0.35355338
        %v610 = vmul.f32 %v606, 0.35355338
        %v611 = vsel %vm311, %v609, -1e+30
        %v612 = vsel %vm312, %v610, -1e+30
        %v613 = vsel %vm407, %v611, -inf
        %614 = vmax.xlane.f32.xlu0 %v613
        %v615 = vpop.xlane.xlu0 %614
        %v616 = vsel %vm407, %v612, -inf
        %617 = vmax.xlane.f32.xlu0 %v616
        %v618 = vpop.xlane.xlu0 %617
        %v619 = vsub.f32 %v611, %v615
        %v620 = vsub.f32 %v612, %v618
        %v621 = vmul.f32 %v619, 1.442695
        %v622 = vpow.pop %v621
        %v623 = vmul.f32 %v620, 1.442695
        %v624 = vpow.pop %v623
        %v625 = vsel %vm407, %v622, 0.0
        %626 = vadd.xlane.f32.xlu0 %v625
        %v627 = vpop.xlane.xlu0 %626
        %v628 = vsel %vm407, %v624, 0.0
        %629 = vadd.xlane.f32.xlu0 %v628
        %v630 = vpop.xlane.xlu0 %629
        %v631 = vrcp.pop %v627
        %v632 = vmul.f32 %v622, %v631
        %v633 = vrcp.pop %v630
        %v634 = vmul.f32 %v624, %v633
        %635 = vrot.lane.b32.xlu0 %v298, 56
        %v636 = vpop.permute.xlu0 %635
        %637 = vrot.lane.b32.xlu0 %v303, 56
        %v638 = vpop.permute.xlu0 %637
        %v642 = vsel %vm407, %v632, 0
        %v645 = vsel %vm407, %v634, 0
        %647 = vmatprep.subr.mxu0 0.0
        %648 = vmatpush1.msra.mxu0 0.0
        %649 = vmatprep.subr.mxu0 0.0
        %650 = vmatpush1.msra.mxu0 0.0
        %651 = vmatprep.subr.mxu0 0.0
        %652 = vmatpush1.msra.mxu0 0.0
        %653 = vmatprep.subr.mxu0 0.0
        %654 = vmatpush1.msra.mxu0 0.0
        %655 = vmatprep.subr.mxu0 0.0
        %656 = vmatpush1.msra.mxu0 0.0
        %657 = vmatprep.subr.mxu0 0.0
        %658 = vmatpush1.msra.mxu0 0.0
        %659 = vmatprep.subr.mxu0 0.0
        %660 = vmatpush1.msra.mxu0 0.0
        %661 = vmatprep.subr.mxu0 0.0
        %662 = vmatpush1.msra.mxu0 0.0
        %663 = vmatprep.subr.mxu0 0.0
        %664 = vmatpush1.msra.mxu0 0.0
        %665 = vmatprep.subr.mxu0 0.0
        %666 = vmatpush1.msra.mxu0 0.0
        %667 = vmatprep.subr.mxu0 0.0
        %668 = vmatpush1.msra.mxu0 0.0
        %669 = vmatprep.subr.mxu0 0.0
        %670 = vmatpush1.msra.mxu0 0.0
        %671 = vmatprep.subr.mxu0 0.0
        %672 = vmatpush1.msra.mxu0 0.0
        %673 = vmatprep.subr.mxu0 0.0
        %674 = vmatpush1.msra.mxu0 0.0
        %675 = vmatprep.subr.mxu0 0.0
        %676 = vmatpush1.msra.mxu0 %v638
        %677 = vmatprep.subr.mxu0 0.0
        %678 = vmatpush1.msra.mxu0 %v636
        %679 = vmatprep.subr.mxu0 0.0
        %680 = vmatpush2.msra.mxu0 0.0
        %681 = vmatprep.subr.mxu0 0.0
        %682 = vmatpush2.msra.mxu0 0.0
        %683 = vmatprep.subr.mxu0 0.0
        %684 = vmatpush2.msra.mxu0 0.0
        %685 = vmatprep.subr.mxu0 0.0
        %686 = vmatpush2.msra.mxu0 0.0
        %687 = vmatprep.subr.mxu0 0.0
        %688 = vmatpush2.msra.mxu0 0.0
        %689 = vmatprep.subr.mxu0 0.0
        %690 = vmatpush2.msra.mxu0 0.0
        %691 = vmatprep.subr.mxu0 0.0
        %692 = vmatpush2.msra.mxu0 0.0
        %693 = vmatprep.subr.mxu0 0.0
        %694 = vmatpush2.msra.mxu0 0.0
        %695 = vmatprep.subr.mxu0 0.0
        %696 = vmatpush2.msra.mxu0 0.0
        %697 = vmatprep.subr.mxu0 0.0
        %698 = vmatpush2.msra.mxu0 0.0
        %699 = vmatprep.subr.mxu0 0.0
        %700 = vmatpush2.msra.mxu0 0.0
        %701 = vmatprep.subr.mxu0 0.0
        %702 = vmatpush2.msra.mxu0 0.0
        %703 = vmatprep.subr.mxu0 0.0
        %704 = vmatpush2.msra.mxu0 0.0
        %705 = vmatprep.subr.mxu0 0.0
        %706 = vmatpush2.msra.mxu0 0.0
        %707 = vmatprep.subr.mxu0 0.0
        %708 = vmatpush2.msra.mxu0 0.0
        %709 = vmatprep.subr.mxu0 0.0
        %710 = vmatpush2.msra.mxu0 0.0
        %711 = vmatprep.mubr.f32.mxu0 0.0
        %712 = vmatmul.mubr.f32.gmra.mxu0 %v642
        %v713 = vpop.f32.mrf.mxu0
        %v714 = vadd.f32 0.0, %v713
        %v715 = vpop.f32.mrf.mxu0
        %716 = vmatprep.mubr.f32.mxu0 0.0
        %717 = vmatmul.mubr.f32.gmra.mxu0 %v645
        %v718 = vpop.f32.mrf.mxu0
        %v719 = vadd.f32 0.0, %v718
        %v720 = vpop.f32.mrf.mxu0
        %721 = vdwg.mxu0
        %s722 = scalar_lea.vmem [#allocation7], 8
        %v723 = vld [vmem:[%s722] sm:$0xff]
        %v725 = vsel %vm319, %v714, 0
        %v728 = vsel %vm319, %v719, 0
        %730 = vmatprep.subr.mxu0 0.0
        %731 = vmatpush1.msra.mxu0 0.0
        %732 = vmatprep.subr.mxu0 0.0
        %733 = vmatpush1.msra.mxu0 0.0
        %734 = vmatprep.subr.mxu0 0.0
        %735 = vmatpush1.msra.mxu0 0.0
        %736 = vmatprep.subr.mxu0 0.0
        %737 = vmatpush1.msra.mxu0 0.0
        %738 = vmatprep.subr.mxu0 0.0
        %739 = vmatpush1.msra.mxu0 0.0
        %740 = vmatprep.subr.mxu0 0.0
        %741 = vmatpush1.msra.mxu0 0.0
        %742 = vmatprep.subr.mxu0 0.0
        %743 = vmatpush1.msra.mxu0 0.0
        %744 = vmatprep.subr.mxu0 0.0
        %745 = vmatpush1.msra.mxu0 0.0
        %746 = vmatprep.subr.mxu0 0.0
        %747 = vmatpush1.msra.mxu0 0.0
        %748 = vmatprep.subr.mxu0 0.0
        %749 = vmatpush1.msra.mxu0 0.0
        %750 = vmatprep.subr.mxu0 0.0
        %751 = vmatpush1.msra.mxu0 0.0
        %752 = vmatprep.subr.mxu0 0.0
        %753 = vmatpush1.msra.mxu0 0.0
        %754 = vmatprep.subr.mxu0 0.0
        %755 = vmatpush1.msra.mxu0 0.0
        %756 = vmatprep.subr.mxu0 0.0
        %757 = vmatpush1.msra.mxu0 0.0
        %758 = vmatprep.subr.mxu0 0.0
        %759 = vmatpush1.msra.mxu0 0.0
        %760 = vmatprep.subr.mxu0 0.0
        %761 = vmatpush1.msra.mxu0 %v723
        %762 = vmatprep.subr.mxu0 0.0
        %763 = vmatpush2.msra.mxu0 0.0
        %764 = vmatprep.subr.mxu0 0.0
        %765 = vmatpush2.msra.mxu0 0.0
        %766 = vmatprep.subr.mxu0 0.0
        %767 = vmatpush2.msra.mxu0 0.0
        %768 = vmatprep.subr.mxu0 0.0
        %769 = vmatpush2.msra.mxu0 0.0
        %770 = vmatprep.subr.mxu0 0.0
        %771 = vmatpush2.msra.mxu0 0.0
        %772 = vmatprep.subr.mxu0 0.0
        %773 = vmatpush2.msra.mxu0 0.0
        %774 = vmatprep.subr.mxu0 0.0
        %775 = vmatpush2.msra.mxu0 0.0
        %776 = vmatprep.subr.mxu0 0.0
        %777 = vmatpush2.msra.mxu0 0.0
        %778 = vmatprep.subr.mxu0 0.0
        %779 = vmatpush2.msra.mxu0 0.0
        %780 = vmatprep.subr.mxu0 0.0
        %781 = vmatpush2.msra.mxu0 0.0
        %782 = vmatprep.subr.mxu0 0.0
        %783 = vmatpush2.msra.mxu0 0.0
        %784 = vmatprep.subr.mxu0 0.0
        %785 = vmatpush2.msra.mxu0 0.0
        %786 = vmatprep.subr.mxu0 0.0
        %787 = vmatpush2.msra.mxu0 0.0
        %788 = vmatprep.subr.mxu0 0.0
        %789 = vmatpush2.msra.mxu0 0.0
        %790 = vmatprep.subr.mxu0 0.0
        %791 = vmatpush2.msra.mxu0 0.0
        %792 = vmatprep.subr.mxu0 0.0
        %793 = vmatpush2.msra.mxu0 0.0
        %794 = vmatprep.mubr.f32.mxu0 0.0
        %795 = vmatmul.mubr.f32.gmra.mxu0 %v725
        %v796 = vpop.f32.mrf.mxu0
        %v797 = vadd.f32 0.0, %v796
        %v798 = vpop.f32.mrf.mxu0
        %799 = vmatprep.mubr.f32.mxu0 0.0
        %800 = vmatmul.mubr.f32.gmra.mxu0 %v728
        %v801 = vpop.f32.mrf.mxu0
        %v802 = vadd.f32 0.0, %v801
        %v803 = vpop.f32.mrf.mxu0
        %804 = vdwg.mxu0
        %v806 = vsel %vm319, %v509, 0
        %v809 = vsel %vm319, %v514, 0
        %811 = vmatprep.subr.mxu0 0.0
        %812 = vmatpush1.msra.mxu0 0.0
        %813 = vmatprep.subr.mxu0 0.0
        %814 = vmatpush1.msra.mxu0 0.0
        %815 = vmatprep.subr.mxu0 0.0
        %816 = vmatpush1.msra.mxu0 0.0
        %817 = vmatprep.subr.mxu0 0.0
        %818 = vmatpush1.msra.mxu0 0.0
        %819 = vmatprep.subr.mxu0 0.0
        %820 = vmatpush1.msra.mxu0 0.0
        %821 = vmatprep.subr.mxu0 0.0
        %822 = vmatpush1.msra.mxu0 0.0
        %823 = vmatprep.subr.mxu0 0.0
        %824 = vmatpush1.msra.mxu0 0.0
        %825 = vmatprep.subr.mxu0 0.0
        %826 = vmatpush1.msra.mxu0 0.0
        %827 = vmatprep.subr.mxu0 0.0
        %828 = vmatpush1.msra.mxu0 0.0
        %829 = vmatprep.subr.mxu0 0.0
        %830 = vmatpush1.msra.mxu0 0.0
        %831 = vmatprep.subr.mxu0 0.0
        %832 = vmatpush1.msra.mxu0 0.0
        %833 = vmatprep.subr.mxu0 0.0
        %834 = vmatpush1.msra.mxu0 0.0
        %835 = vmatprep.subr.mxu0 0.0
        %836 = vmatpush1.msra.mxu0 0.0
        %837 = vmatprep.subr.mxu0 0.0
        %838 = vmatpush1.msra.mxu0 0.0
        %839 = vmatprep.subr.mxu0 0.0
        %840 = vmatpush1.msra.mxu0 0.0
        %841 = vmatprep.subr.mxu0 0.0
        %842 = vmatpush1.msra.mxu0 %v517
        %843 = vmatprep.subr.mxu0 0.0
        %844 = vmatpush2.msra.mxu0 0.0
        %845 = vmatprep.subr.mxu0 0.0
        %846 = vmatpush2.msra.mxu0 0.0
        %847 = vmatprep.subr.mxu0 0.0
        %848 = vmatpush2.msra.mxu0 0.0
        %849 = vmatprep.subr.mxu0 0.0
        %850 = vmatpush2.msra.mxu0 0.0
        %851 = vmatprep.subr.mxu0 0.0
        %852 = vmatpush2.msra.mxu0 0.0
        %853 = vmatprep.subr.mxu0 0.0
        %854 = vmatpush2.msra.mxu0 0.0
        %855 = vmatprep.subr.mxu0 0.0
        %856 = vmatpush2.msra.mxu0 0.0
        %857 = vmatprep.subr.mxu0 0.0
        %858 = vmatpush2.msra.mxu0 0.0
        %859 = vmatprep.subr.mxu0 0.0
        %860 = vmatpush2.msra.mxu0 0.0
        %861 = vmatprep.subr.mxu0 0.0
        %862 = vmatpush2.msra.mxu0 0.0
        %863 = vmatprep.subr.mxu0 0.0
        %864 = vmatpush2.msra.mxu0 0.0
        %865 = vmatprep.subr.mxu0 0.0
        %866 = vmatpush2.msra.mxu0 0.0
        %867 = vmatprep.subr.mxu0 0.0
        %868 = vmatpush2.msra.mxu0 0.0
        %869 = vmatprep.subr.mxu0 0.0
        %870 = vmatpush2.msra.mxu0 0.0
        %871 = vmatprep.subr.mxu0 0.0
        %872 = vmatpush2.msra.mxu0 0.0
        %873 = vmatprep.subr.mxu0 0.0
        %874 = vmatpush2.msra.mxu0 0.0
        %875 = vmatprep.mubr.f32.mxu0 0.0
        %876 = vmatmul.mubr.f32.gmra.mxu0 %v806
        %v877 = vpop.f32.mrf.mxu0
        %v878 = vadd.f32 %v797, %v877
        %v879 = vpop.f32.mrf.mxu0
        %880 = vmatprep.mubr.f32.mxu0 0.0
        %881 = vmatmul.mubr.f32.gmra.mxu0 %v809
        %v882 = vpop.f32.mrf.mxu0
        %v883 = vadd.f32 %v802, %v882
        %v884 = vpop.f32.mrf.mxu0
        %885 = vdwg.mxu0
        %886 = vrot.lane.b32.xlu0 %v298, 112
        %v887 = vpop.permute.xlu0 %886
        %888 = vrot.lane.b32.xlu0 %v303, 112
        %v889 = vpop.permute.xlu0 %888
        %890 = vrot.lane.b32.xlu0 %v298, 80
        %v891 = vpop.permute.xlu0 %890
        %892 = vrot.lane.b32.xlu0 %v303, 80
        %v893 = vpop.permute.xlu0 %892
        %v894 = vsel %vm319, %v887, 0
        %v896 = vsel %vm319, %v889, 0
        %v898 = vsel %vm319, %v891, 0
        %v900 = vsel %vm319, %v893, 0
        %902 = vmatprep.subr.mxu0 0.0
        %903 = vmatpush1.xpose.msra.mxu0 0.0
        %904 = vmatprep.subr.mxu0 0.0
        %905 = vmatpush1.xpose.msra.mxu0 0.0
        %906 = vmatprep.subr.mxu0 0.0
        %907 = vmatpush1.xpose.msra.mxu0 0.0
        %908 = vmatprep.subr.mxu0 0.0
        %909 = vmatpush1.xpose.msra.mxu0 0.0
        %910 = vmatprep.subr.mxu0 0.0
        %911 = vmatpush1.xpose.msra.mxu0 0.0
        %912 = vmatprep.subr.mxu0 0.0
        %913 = vmatpush1.xpose.msra.mxu0 0.0
        %914 = vmatprep.subr.mxu0 0.0
        %915 = vmatpush1.xpose.msra.mxu0 0.0
        %916 = vmatprep.subr.mxu0 0.0
        %917 = vmatpush1.xpose.msra.mxu0 0.0
        %918 = vmatprep.subr.mxu0 0.0
        %919 = vmatpush1.xpose.msra.mxu0 0.0
        %920 = vmatprep.subr.mxu0 0.0
        %921 = vmatpush1.xpose.msra.mxu0 0.0
        %922 = vmatprep.subr.mxu0 0.0
        %923 = vmatpush1.xpose.msra.mxu0 0.0
        %924 = vmatprep.subr.mxu0 0.0
        %925 = vmatpush1.xpose.msra.mxu0 0.0
        %926 = vmatprep.subr.mxu0 0.0
        %927 = vmatpush1.xpose.msra.mxu0 0.0
        %928 = vmatprep.subr.mxu0 0.0
        %929 = vmatpush1.xpose.msra.mxu0 0.0
        %930 = vmatprep.subr.mxu0 0.0
        %931 = vmatpush1.xpose.msra.mxu0 %v900
        %932 = vmatprep.subr.mxu0 0.0
        %933 = vmatpush1.xpose.msra.mxu0 %v898
        %934 = vmatprep.subr.mxu0 0.0
        %935 = vmatpush2.xpose.msra.mxu0 0.0
        %936 = vmatprep.subr.mxu0 0.0
        %937 = vmatpush2.xpose.msra.mxu0 0.0
        %938 = vmatprep.subr.mxu0 0.0
        %939 = vmatpush2.xpose.msra.mxu0 0.0
        %940 = vmatprep.subr.mxu0 0.0
        %941 = vmatpush2.xpose.msra.mxu0 0.0
        %942 = vmatprep.subr.mxu0 0.0
        %943 = vmatpush2.xpose.msra.mxu0 0.0
        %944 = vmatprep.subr.mxu0 0.0
        %945 = vmatpush2.xpose.msra.mxu0 0.0
        %946 = vmatprep.subr.mxu0 0.0
        %947 = vmatpush2.xpose.msra.mxu0 0.0
        %948 = vmatprep.subr.mxu0 0.0
        %949 = vmatpush2.xpose.msra.mxu0 0.0
        %950 = vmatprep.subr.mxu0 0.0
        %951 = vmatpush2.xpose.msra.mxu0 0.0
        %952 = vmatprep.subr.mxu0 0.0
        %953 = vmatpush2.xpose.msra.mxu0 0.0
        %954 = vmatprep.subr.mxu0 0.0
        %955 = vmatpush2.xpose.msra.mxu0 0.0
        %956 = vmatprep.subr.mxu0 0.0
        %957 = vmatpush2.xpose.msra.mxu0 0.0
        %958 = vmatprep.subr.mxu0 0.0
        %959 = vmatpush2.xpose.msra.mxu0 0.0
        %960 = vmatprep.subr.mxu0 0.0
        %961 = vmatpush2.xpose.msra.mxu0 0.0
        %962 = vmatprep.subr.mxu0 0.0
        %963 = vmatpush2.xpose.msra.mxu0 0.0
        %964 = vmatprep.subr.mxu0 0.0
        %965 = vmatpush2.xpose.msra.mxu0 0.0
        %966 = vmatprep.mubr.f32.mxu0 0.0
        %967 = vmatmul.mubr.f32.gmra.mxu0 %v894
        %v968 = vpop.f32.mrf.mxu0
        %v969 = vadd.f32 0.0, %v968
        %v970 = vpop.f32.mrf.mxu0
        %971 = vmatprep.mubr.f32.mxu0 0.0
        %972 = vmatmul.mubr.f32.gmra.mxu0 %v896
        %v973 = vpop.f32.mrf.mxu0
        %v974 = vadd.f32 0.0, %v973
        %v975 = vpop.f32.mrf.mxu0
        %976 = vdwg.mxu0
        %v977 = vmul.f32 %v969, 0.35355338
        %v978 = vmul.f32 %v974, 0.35355338
        %v979 = vsel %vm311, %v977, -1e+30
        %v980 = vsel %vm312, %v978, -1e+30
        %v981 = vsel %vm407, %v979, -inf
        %982 = vmax.xlane.f32.xlu0 %v981
        %v983 = vpop.xlane.xlu0 %982
        %v984 = vsel %vm407, %v980, -inf
        %985 = vmax.xlane.f32.xlu0 %v984
        %v986 = vpop.xlane.xlu0 %985
        %v987 = vsub.f32 %v979, %v983
        %v988 = vsub.f32 %v980, %v986
        %v989 = vmul.f32 %v987, 1.442695
        %v990 = vpow.pop %v989
        %v991 = vmul.f32 %v988, 1.442695
        %v992 = vpow.pop %v991
        %v993 = vsel %vm407, %v990, 0.0
        %994 = vadd.xlane.f32.xlu0 %v993
        %v995 = vpop.xlane.xlu0 %994
        %v996 = vsel %vm407, %v992, 0.0
        %997 = vadd.xlane.f32.xlu0 %v996
        %v998 = vpop.xlane.xlu0 %997
        %v999 = vrcp.pop %v995
        %v1000 = vmul.f32 %v990, %v999
        %v1001 = vrcp.pop %v998
        %v1002 = vmul.f32 %v992, %v1001
        %1003 = vrot.lane.b32.xlu0 %v298, 48
        %v1004 = vpop.permute.xlu0 %1003
        %1005 = vrot.lane.b32.xlu0 %v303, 48
        %v1006 = vpop.permute.xlu0 %1005
        %v1010 = vsel %vm407, %v1000, 0
        %v1013 = vsel %vm407, %v1002, 0
        %1015 = vmatprep.subr.mxu0 0.0
        %1016 = vmatpush1.msra.mxu0 0.0
        %1017 = vmatprep.subr.mxu0 0.0
        %1018 = vmatpush1.msra.mxu0 0.0
        %1019 = vmatprep.subr.mxu0 0.0
        %1020 = vmatpush1.msra.mxu0 0.0
        %1021 = vmatprep.subr.mxu0 0.0
        %1022 = vmatpush1.msra.mxu0 0.0
        %1023 = vmatprep.subr.mxu0 0.0
        %1024 = vmatpush1.msra.mxu0 0.0
        %1025 = vmatprep.subr.mxu0 0.0
        %1026 = vmatpush1.msra.mxu0 0.0
        %1027 = vmatprep.subr.mxu0 0.0
        %1028 = vmatpush1.msra.mxu0 0.0
        %1029 = vmatprep.subr.mxu0 0.0
        %1030 = vmatpush1.msra.mxu0 0.0
        %1031 = vmatprep.subr.mxu0 0.0
        %1032 = vmatpush1.msra.mxu0 0.0
        %1033 = vmatprep.subr.mxu0 0.0
        %1034 = vmatpush1.msra.mxu0 0.0
        %1035 = vmatprep.subr.mxu0 0.0
        %1036 = vmatpush1.msra.mxu0 0.0
        %1037 = vmatprep.subr.mxu0 0.0
        %1038 = vmatpush1.msra.mxu0 0.0
        %1039 = vmatprep.subr.mxu0 0.0
        %1040 = vmatpush1.msra.mxu0 0.0
        %1041 = vmatprep.subr.mxu0 0.0
        %1042 = vmatpush1.msra.mxu0 0.0
        %1043 = vmatprep.subr.mxu0 0.0
        %1044 = vmatpush1.msra.mxu0 %v1006
        %1045 = vmatprep.subr.mxu0 0.0
        %1046 = vmatpush1.msra.mxu0 %v1004
        %1047 = vmatprep.subr.mxu0 0.0
        %1048 = vmatpush2.msra.mxu0 0.0
        %1049 = vmatprep.subr.mxu0 0.0
        %1050 = vmatpush2.msra.mxu0 0.0
        %1051 = vmatprep.subr.mxu0 0.0
        %1052 = vmatpush2.msra.mxu0 0.0
        %1053 = vmatprep.subr.mxu0 0.0
        %1054 = vmatpush2.msra.mxu0 0.0
        %1055 = vmatprep.subr.mxu0 0.0
        %1056 = vmatpush2.msra.mxu0 0.0
        %1057 = vmatprep.subr.mxu0 0.0
        %1058 = vmatpush2.msra.mxu0 0.0
        %1059 = vmatprep.subr.mxu0 0.0
        %1060 = vmatpush2.msra.mxu0 0.0
        %1061 = vmatprep.subr.mxu0 0.0
        %1062 = vmatpush2.msra.mxu0 0.0
        %1063 = vmatprep.subr.mxu0 0.0
        %1064 = vmatpush2.msra.mxu0 0.0
        %1065 = vmatprep.subr.mxu0 0.0
        %1066 = vmatpush2.msra.mxu0 0.0
        %1067 = vmatprep.subr.mxu0 0.0
        %1068 = vmatpush2.msra.mxu0 0.0
        %1069 = vmatprep.subr.mxu0 0.0
        %1070 = vmatpush2.msra.mxu0 0.0
        %1071 = vmatprep.subr.mxu0 0.0
        %1072 = vmatpush2.msra.mxu0 0.0
        %1073 = vmatprep.subr.mxu0 0.0
        %1074 = vmatpush2.msra.mxu0 0.0
        %1075 = vmatprep.subr.mxu0 0.0
        %1076 = vmatpush2.msra.mxu0 0.0
        %1077 = vmatprep.subr.mxu0 0.0
        %1078 = vmatpush2.msra.mxu0 0.0
        %1079 = vmatprep.mubr.f32.mxu0 0.0
        %1080 = vmatmul.mubr.f32.gmra.mxu0 %v1010
        %v1081 = vpop.f32.mrf.mxu0
        %v1082 = vadd.f32 0.0, %v1081
        %v1083 = vpop.f32.mrf.mxu0
        %1084 = vmatprep.mubr.f32.mxu0 0.0
        %1085 = vmatmul.mubr.f32.gmra.mxu0 %v1013
        %v1086 = vpop.f32.mrf.mxu0
        %v1087 = vadd.f32 0.0, %v1086
        %v1088 = vpop.f32.mrf.mxu0
        %1089 = vdwg.mxu0
        %s1090 = scalar_lea.vmem [#allocation7], 16
        %v1091 = vld [vmem:[%s1090] sm:$0xff]
        %v1093 = vsel %vm319, %v1082, 0
        %v1096 = vsel %vm319, %v1087, 0
        %1098 = vmatprep.subr.mxu0 0.0
        %1099 = vmatpush1.msra.mxu0 0.0
        %1100 = vmatprep.subr.mxu0 0.0
        %1101 = vmatpush1.msra.mxu0 0.0
        %1102 = vmatprep.subr.mxu0 0.0
        %1103 = vmatpush1.msra.mxu0 0.0
        %1104 = vmatprep.subr.mxu0 0.0
        %1105 = vmatpush1.msra.mxu0 0.0
        %1106 = vmatprep.subr.mxu0 0.0
        %1107 = vmatpush1.msra.mxu0 0.0
        %1108 = vmatprep.subr.mxu0 0.0
        %1109 = vmatpush1.msra.mxu0 0.0
        %1110 = vmatprep.subr.mxu0 0.0
        %1111 = vmatpush1.msra.mxu0 0.0
        %1112 = vmatprep.subr.mxu0 0.0
        %1113 = vmatpush1.msra.mxu0 0.0
        %1114 = vmatprep.subr.mxu0 0.0
        %1115 = vmatpush1.msra.mxu0 0.0
        %1116 = vmatprep.subr.mxu0 0.0
        %1117 = vmatpush1.msra.mxu0 0.0
        %1118 = vmatprep.subr.mxu0 0.0
        %1119 = vmatpush1.msra.mxu0 0.0
        %1120 = vmatprep.subr.mxu0 0.0
        %1121 = vmatpush1.msra.mxu0 0.0
        %1122 = vmatprep.subr.mxu0 0.0
        %1123 = vmatpush1.msra.mxu0 0.0
        %1124 = vmatprep.subr.mxu0 0.0
        %1125 = vmatpush1.msra.mxu0 0.0
        %1126 = vmatprep.subr.mxu0 0.0
        %1127 = vmatpush1.msra.mxu0 0.0
        %1128 = vmatprep.subr.mxu0 0.0
        %1129 = vmatpush1.msra.mxu0 %v1091
        %1130 = vmatprep.subr.mxu0 0.0
        %1131 = vmatpush2.msra.mxu0 0.0
        %1132 = vmatprep.subr.mxu0 0.0
        %1133 = vmatpush2.msra.mxu0 0.0
        %1134 = vmatprep.subr.mxu0 0.0
        %1135 = vmatpush2.msra.mxu0 0.0
        %1136 = vmatprep.subr.mxu0 0.0
        %1137 = vmatpush2.msra.mxu0 0.0
        %1138 = vmatprep.subr.mxu0 0.0
        %1139 = vmatpush2.msra.mxu0 0.0
        %1140 = vmatprep.subr.mxu0 0.0
        %1141 = vmatpush2.msra.mxu0 0.0
        %1142 = vmatprep.subr.mxu0 0.0
        %1143 = vmatpush2.msra.mxu0 0.0
        %1144 = vmatprep.subr.mxu0 0.0
        %1145 = vmatpush2.msra.mxu0 0.0
        %1146 = vmatprep.subr.mxu0 0.0
        %1147 = vmatpush2.msra.mxu0 0.0
        %1148 = vmatprep.subr.mxu0 0.0
        %1149 = vmatpush2.msra.mxu0 0.0
        %1150 = vmatprep.subr.mxu0 0.0
        %1151 = vmatpush2.msra.mxu0 0.0
        %1152 = vmatprep.subr.mxu0 0.0
        %1153 = vmatpush2.msra.mxu0 0.0
        %1154 = vmatprep.subr.mxu0 0.0
        %1155 = vmatpush2.msra.mxu0 0.0
        %1156 = vmatprep.subr.mxu0 0.0
        %1157 = vmatpush2.msra.mxu0 0.0
        %1158 = vmatprep.subr.mxu0 0.0
        %1159 = vmatpush2.msra.mxu0 0.0
        %1160 = vmatprep.subr.mxu0 0.0
        %1161 = vmatpush2.msra.mxu0 0.0
        %1162 = vmatprep.mubr.f32.mxu0 0.0
        %1163 = vmatmul.mubr.f32.gmra.mxu0 %v1093
        %v1164 = vpop.f32.mrf.mxu0
        %v1165 = vadd.f32 0.0, %v1164
        %v1166 = vpop.f32.mrf.mxu0
        %1167 = vmatprep.mubr.f32.mxu0 0.0
        %1168 = vmatmul.mubr.f32.gmra.mxu0 %v1096
        %v1169 = vpop.f32.mrf.mxu0
        %v1170 = vadd.f32 0.0, %v1169
        %v1171 = vpop.f32.mrf.mxu0
        %1172 = vdwg.mxu0
        %v1173 = vadd.f32 %v878, %v1165
        %v1174 = vadd.f32 %v883, %v1170
        %1175 = vrot.lane.b32.xlu0 %v298, 104
        %v1176 = vpop.permute.xlu0 %1175
        %1177 = vrot.lane.b32.xlu0 %v303, 104
        %v1178 = vpop.permute.xlu0 %1177
        %1179 = vrot.lane.b32.xlu0 %v298, 72
        %v1180 = vpop.permute.xlu0 %1179
        %1181 = vrot.lane.b32.xlu0 %v303, 72
        %v1182 = vpop.permute.xlu0 %1181
        %v1183 = vsel %vm319, %v1176, 0
        %v1185 = vsel %vm319, %v1178, 0
        %v1187 = vsel %vm319, %v1180, 0
        %v1189 = vsel %vm319, %v1182, 0
        %1191 = vmatprep.subr.mxu0 0.0
        %1192 = vmatpush1.xpose.msra.mxu0 0.0
        %1193 = vmatprep.subr.mxu0 0.0
        %1194 = vmatpush1.xpose.msra.mxu0 0.0
        %1195 = vmatprep.subr.mxu0 0.0
        %1196 = vmatpush1.xpose.msra.mxu0 0.0
        %1197 = vmatprep.subr.mxu0 0.0
        %1198 = vmatpush1.xpose.msra.mxu0 0.0
        %1199 = vmatprep.subr.mxu0 0.0
        %1200 = vmatpush1.xpose.msra.mxu0 0.0
        %1201 = vmatprep.subr.mxu0 0.0
        %1202 = vmatpush1.xpose.msra.mxu0 0.0
        %1203 = vmatprep.subr.mxu0 0.0
        %1204 = vmatpush1.xpose.msra.mxu0 0.0
        %1205 = vmatprep.subr.mxu0 0.0
        %1206 = vmatpush1.xpose.msra.mxu0 0.0
        %1207 = vmatprep.subr.mxu0 0.0
        %1208 = vmatpush1.xpose.msra.mxu0 0.0
        %1209 = vmatprep.subr.mxu0 0.0
        %1210 = vmatpush1.xpose.msra.mxu0 0.0
        %1211 = vmatprep.subr.mxu0 0.0
        %1212 = vmatpush1.xpose.msra.mxu0 0.0
        %1213 = vmatprep.subr.mxu0 0.0
        %1214 = vmatpush1.xpose.msra.mxu0 0.0
        %1215 = vmatprep.subr.mxu0 0.0
        %1216 = vmatpush1.xpose.msra.mxu0 0.0
        %1217 = vmatprep.subr.mxu0 0.0
        %1218 = vmatpush1.xpose.msra.mxu0 0.0
        %1219 = vmatprep.subr.mxu0 0.0
        %1220 = vmatpush1.xpose.msra.mxu0 %v1189
        %1221 = vmatprep.subr.mxu0 0.0
        %1222 = vmatpush1.xpose.msra.mxu0 %v1187
        %1223 = vmatprep.subr.mxu0 0.0
        %1224 = vmatpush2.xpose.msra.mxu0 0.0
        %1225 = vmatprep.subr.mxu0 0.0
        %1226 = vmatpush2.xpose.msra.mxu0 0.0
        %1227 = vmatprep.subr.mxu0 0.0
        %1228 = vmatpush2.xpose.msra.mxu0 0.0
        %1229 = vmatprep.subr.mxu0 0.0
        %1230 = vmatpush2.xpose.msra.mxu0 0.0
        %1231 = vmatprep.subr.mxu0 0.0
        %1232 = vmatpush2.xpose.msra.mxu0 0.0
        %1233 = vmatprep.subr.mxu0 0.0
        %1234 = vmatpush2.xpose.msra.mxu0 0.0
        %1235 = vmatprep.subr.mxu0 0.0
        %1236 = vmatpush2.xpose.msra.mxu0 0.0
        %1237 = vmatprep.subr.mxu0 0.0
        %1238 = vmatpush2.xpose.msra.mxu0 0.0
        %1239 = vmatprep.subr.mxu0 0.0
        %1240 = vmatpush2.xpose.msra.mxu0 0.0
        %1241 = vmatprep.subr.mxu0 0.0
        %1242 = vmatpush2.xpose.msra.mxu0 0.0
        %1243 = vmatprep.subr.mxu0 0.0
        %1244 = vmatpush2.xpose.msra.mxu0 0.0
        %1245 = vmatprep.subr.mxu0 0.0
        %1246 = vmatpush2.xpose.msra.mxu0 0.0
        %1247 = vmatprep.subr.mxu0 0.0
        %1248 = vmatpush2.xpose.msra.mxu0 0.0
        %1249 = vmatprep.subr.mxu0 0.0
        %1250 = vmatpush2.xpose.msra.mxu0 0.0
        %1251 = vmatprep.subr.mxu0 0.0
        %1252 = vmatpush2.xpose.msra.mxu0 0.0
        %1253 = vmatprep.subr.mxu0 0.0
        %1254 = vmatpush2.xpose.msra.mxu0 0.0
        %1255 = vmatprep.mubr.f32.mxu0 0.0
        %1256 = vmatmul.mubr.f32.gmra.mxu0 %v1183
        %v1257 = vpop.f32.mrf.mxu0
        %v1258 = vadd.f32 0.0, %v1257
        %v1259 = vpop.f32.mrf.mxu0
        %1260 = vmatprep.mubr.f32.mxu0 0.0
        %1261 = vmatmul.mubr.f32.gmra.mxu0 %v1185
        %v1262 = vpop.f32.mrf.mxu0
        %v1263 = vadd.f32 0.0, %v1262
        %v1264 = vpop.f32.mrf.mxu0
        %1265 = vdwg.mxu0
        %v1266 = vmul.f32 %v1258, 0.35355338
        %v1267 = vmul.f32 %v1263, 0.35355338
        %v1268 = vsel %vm311, %v1266, -1e+30
        %v1269 = vsel %vm312, %v1267, -1e+30
        %v1270 = vsel %vm407, %v1268, -inf
        %1271 = vmax.xlane.f32.xlu0 %v1270
        %v1272 = vpop.xlane.xlu0 %1271
        %v1273 = vsel %vm407, %v1269, -inf
        %1274 = vmax.xlane.f32.xlu0 %v1273
        %v1275 = vpop.xlane.xlu0 %1274
        %v1276 = vsub.f32 %v1268, %v1272
        %v1277 = vsub.f32 %v1269, %v1275
        %v1278 = vmul.f32 %v1276, 1.442695
        %v1279 = vpow.pop %v1278
        %v1280 = vmul.f32 %v1277, 1.442695
        %v1281 = vpow.pop %v1280
        %v1282 = vsel %vm407, %v1279, 0.0
        %1283 = vadd.xlane.f32.xlu0 %v1282
        %v1284 = vpop.xlane.xlu0 %1283
        %v1285 = vsel %vm407, %v1281, 0.0
        %1286 = vadd.xlane.f32.xlu0 %v1285
        %v1287 = vpop.xlane.xlu0 %1286
        %v1288 = vrcp.pop %v1284
        %v1289 = vmul.f32 %v1279, %v1288
        %v1290 = vrcp.pop %v1287
        %v1291 = vmul.f32 %v1281, %v1290
        %1292 = vrot.lane.b32.xlu0 %v298, 40
        %v1293 = vpop.permute.xlu0 %1292
        %1294 = vrot.lane.b32.xlu0 %v303, 40
        %v1295 = vpop.permute.xlu0 %1294
        %v1299 = vsel %vm407, %v1289, 0
        %v1302 = vsel %vm407, %v1291, 0
        %1304 = vmatprep.subr.mxu0 0.0
        %1305 = vmatpush1.msra.mxu0 0.0
        %1306 = vmatprep.subr.mxu0 0.0
        %1307 = vmatpush1.msra.mxu0 0.0
        %1308 = vmatprep.subr.mxu0 0.0
        %1309 = vmatpush1.msra.mxu0 0.0
        %1310 = vmatprep.subr.mxu0 0.0
        %1311 = vmatpush1.msra.mxu0 0.0
        %1312 = vmatprep.subr.mxu0 0.0
        %1313 = vmatpush1.msra.mxu0 0.0
        %1314 = vmatprep.subr.mxu0 0.0
        %1315 = vmatpush1.msra.mxu0 0.0
        %1316 = vmatprep.subr.mxu0 0.0
        %1317 = vmatpush1.msra.mxu0 0.0
        %1318 = vmatprep.subr.mxu0 0.0
        %1319 = vmatpush1.msra.mxu0 0.0
        %1320 = vmatprep.subr.mxu0 0.0
        %1321 = vmatpush1.msra.mxu0 0.0
        %1322 = vmatprep.subr.mxu0 0.0
        %1323 = vmatpush1.msra.mxu0 0.0
        %1324 = vmatprep.subr.mxu0 0.0
        %1325 = vmatpush1.msra.mxu0 0.0
        %1326 = vmatprep.subr.mxu0 0.0
        %1327 = vmatpush1.msra.mxu0 0.0
        %1328 = vmatprep.subr.mxu0 0.0
        %1329 = vmatpush1.msra.mxu0 0.0
        %1330 = vmatprep.subr.mxu0 0.0
        %1331 = vmatpush1.msra.mxu0 0.0
        %1332 = vmatprep.subr.mxu0 0.0
        %1333 = vmatpush1.msra.mxu0 %v1295
        %1334 = vmatprep.subr.mxu0 0.0
        %1335 = vmatpush1.msra.mxu0 %v1293
        %1336 = vmatprep.subr.mxu0 0.0
        %1337 = vmatpush2.msra.mxu0 0.0
        %1338 = vmatprep.subr.mxu0 0.0
        %1339 = vmatpush2.msra.mxu0 0.0
        %1340 = vmatprep.subr.mxu0 0.0
        %1341 = vmatpush2.msra.mxu0 0.0
        %1342 = vmatprep.subr.mxu0 0.0
        %1343 = vmatpush2.msra.mxu0 0.0
        %1344 = vmatprep.subr.mxu0 0.0
        %1345 = vmatpush2.msra.mxu0 0.0
        %1346 = vmatprep.subr.mxu0 0.0
        %1347 = vmatpush2.msra.mxu0 0.0
        %1348 = vmatprep.subr.mxu0 0.0
        %1349 = vmatpush2.msra.mxu0 0.0
        %1350 = vmatprep.subr.mxu0 0.0
        %1351 = vmatpush2.msra.mxu0 0.0
        %1352 = vmatprep.subr.mxu0 0.0
        %1353 = vmatpush2.msra.mxu0 0.0
        %1354 = vmatprep.subr.mxu0 0.0
        %1355 = vmatpush2.msra.mxu0 0.0
        %1356 = vmatprep.subr.mxu0 0.0
        %1357 = vmatpush2.msra.mxu0 0.0
        %1358 = vmatprep.subr.mxu0 0.0
        %1359 = vmatpush2.msra.mxu0 0.0
        %1360 = vmatprep.subr.mxu0 0.0
        %1361 = vmatpush2.msra.mxu0 0.0
        %1362 = vmatprep.subr.mxu0 0.0
        %1363 = vmatpush2.msra.mxu0 0.0
        %1364 = vmatprep.subr.mxu0 0.0
        %1365 = vmatpush2.msra.mxu0 0.0
        %1366 = vmatprep.subr.mxu0 0.0
        %1367 = vmatpush2.msra.mxu0 0.0
        %1368 = vmatprep.mubr.f32.mxu0 0.0
        %1369 = vmatmul.mubr.f32.gmra.mxu0 %v1299
        %v1370 = vpop.f32.mrf.mxu0
        %v1371 = vadd.f32 0.0, %v1370
        %v1372 = vpop.f32.mrf.mxu0
        %1373 = vmatprep.mubr.f32.mxu0 0.0
        %1374 = vmatmul.mubr.f32.gmra.mxu0 %v1302
        %v1375 = vpop.f32.mrf.mxu0
        %v1376 = vadd.f32 0.0, %v1375
        %v1377 = vpop.f32.mrf.mxu0
        %1378 = vdwg.mxu0
        %s1379 = scalar_lea.vmem [#allocation7], 24
        %v1380 = vld [vmem:[%s1379] sm:$0xff]
        %v1382 = vsel %vm319, %v1371, 0
        %v1385 = vsel %vm319, %v1376, 0
        %1387 = vmatprep.subr.mxu0 0.0
        %1388 = vmatpush1.msra.mxu0 0.0
        %1389 = vmatprep.subr.mxu0 0.0
        %1390 = vmatpush1.msra.mxu0 0.0
        %1391 = vmatprep.subr.mxu0 0.0
        %1392 = vmatpush1.msra.mxu0 0.0
        %1393 = vmatprep.subr.mxu0 0.0
        %1394 = vmatpush1.msra.mxu0 0.0
        %1395 = vmatprep.subr.mxu0 0.0
        %1396 = vmatpush1.msra.mxu0 0.0
        %1397 = vmatprep.subr.mxu0 0.0
        %1398 = vmatpush1.msra.mxu0 0.0
        %1399 = vmatprep.subr.mxu0 0.0
        %1400 = vmatpush1.msra.mxu0 0.0
        %1401 = vmatprep.subr.mxu0 0.0
        %1402 = vmatpush1.msra.mxu0 0.0
        %1403 = vmatprep.subr.mxu0 0.0
        %1404 = vmatpush1.msra.mxu0 0.0
        %1405 = vmatprep.subr.mxu0 0.0
        %1406 = vmatpush1.msra.mxu0 0.0
        %1407 = vmatprep.subr.mxu0 0.0
        %1408 = vmatpush1.msra.mxu0 0.0
        %1409 = vmatprep.subr.mxu0 0.0
        %1410 = vmatpush1.msra.mxu0 0.0
        %1411 = vmatprep.subr.mxu0 0.0
        %1412 = vmatpush1.msra.mxu0 0.0
        %1413 = vmatprep.subr.mxu0 0.0
        %1414 = vmatpush1.msra.mxu0 0.0
        %1415 = vmatprep.subr.mxu0 0.0
        %1416 = vmatpush1.msra.mxu0 0.0
        %1417 = vmatprep.subr.mxu0 0.0
        %1418 = vmatpush1.msra.mxu0 %v1380
        %1419 = vmatprep.subr.mxu0 0.0
        %1420 = vmatpush2.msra.mxu0 0.0
        %1421 = vmatprep.subr.mxu0 0.0
        %1422 = vmatpush2.msra.mxu0 0.0
        %1423 = vmatprep.subr.mxu0 0.0
        %1424 = vmatpush2.msra.mxu0 0.0
        %1425 = vmatprep.subr.mxu0 0.0
        %1426 = vmatpush2.msra.mxu0 0.0
        %1427 = vmatprep.subr.mxu0 0.0
        %1428 = vmatpush2.msra.mxu0 0.0
        %1429 = vmatprep.subr.mxu0 0.0
        %1430 = vmatpush2.msra.mxu0 0.0
        %1431 = vmatprep.subr.mxu0 0.0
        %1432 = vmatpush2.msra.mxu0 0.0
        %1433 = vmatprep.subr.mxu0 0.0
        %1434 = vmatpush2.msra.mxu0 0.0
        %1435 = vmatprep.subr.mxu0 0.0
        %1436 = vmatpush2.msra.mxu0 0.0
        %1437 = vmatprep.subr.mxu0 0.0
        %1438 = vmatpush2.msra.mxu0 0.0
        %1439 = vmatprep.subr.mxu0 0.0
        %1440 = vmatpush2.msra.mxu0 0.0
        %1441 = vmatprep.subr.mxu0 0.0
        %1442 = vmatpush2.msra.mxu0 0.0
        %1443 = vmatprep.subr.mxu0 0.0
        %1444 = vmatpush2.msra.mxu0 0.0
        %1445 = vmatprep.subr.mxu0 0.0
        %1446 = vmatpush2.msra.mxu0 0.0
        %1447 = vmatprep.subr.mxu0 0.0
        %1448 = vmatpush2.msra.mxu0 0.0
        %1449 = vmatprep.subr.mxu0 0.0
        %1450 = vmatpush2.msra.mxu0 0.0
        %1451 = vmatprep.mubr.f32.mxu0 0.0
        %1452 = vmatmul.mubr.f32.gmra.mxu0 %v1382
        %v1453 = vpop.f32.mrf.mxu0
        %v1454 = vadd.f32 0.0, %v1453
        %v1455 = vpop.f32.mrf.mxu0
        %1456 = vmatprep.mubr.f32.mxu0 0.0
        %1457 = vmatmul.mubr.f32.gmra.mxu0 %v1385
        %v1458 = vpop.f32.mrf.mxu0
        %v1459 = vadd.f32 0.0, %v1458
        %v1460 = vpop.f32.mrf.mxu0
        %1461 = vdwg.mxu0
        %v1462 = vadd.f32 %v1173, %v1454
        %v1463 = vadd.f32 %v1174, %v1459
        %1464 = vst.msk [vmem:[%s217] sm:$0xff] %vm224, %v1462
        %1465 = vst.msk [vmem:[%s217 + $0x8] sm:$0xff] %vm224, %v1463
        %s1466 = sand.u32 %s97, 1
        %s1467 = scalar_lea.sflag [#allocation4], %s1466
        %s1468 = sand.u32 %s97, 1
        %s1469 = smul.addr %s1468, 16
        %s1470 = scalar_lea.vmem [#allocation8], %s1469
        // Predicated region
        $region45: #{tpu_custom_call.1} parent=31 // pred_check
          %p1471 = pneg %p107
        $region46: #{tpu_custom_call.1} parent=31 // pred_check_branch
          %1473 = sbr.rel (%p1471) target = $region48
        $region47: #{tpu_custom_call.1} parent=31 // pred_region
          %s1475 = ssub.s32 256, 256
          %1476 = vsyncadd %s1467, %s1475
          %s1477 = smul.addr %s21, 2
          %s1478 = smul.addr %s1477, 128
          %s1479 = scalar_lea.hbm %s3, %s1478
          %s1480 = sshll.u32 %s1470, 4
          %s1481 = int_to_ptr.vmem [resolvable:$true] %s1480
          %1486 = dma.vmem_to_hbm [thread:$0]  %s1481, 256, %s1479, %s1467, 128, 128, 8
        $region48: #{tpu_custom_call.1} parent=31 // pred_fallthru
          _
      $region32: #{tpu_custom_call.1} parent=5 // pred_fallthru
        _
      %p1487 = scmp.le.s32.totalorder 2, %s16
      // Predicated region
      $region49: #{tpu_custom_call.1} parent=5 // pred_check
        %p1488 = pneg %p1487
      $region50: #{tpu_custom_call.1} parent=5 // pred_check_branch
        %1490 = sbr.rel (%p1488) target = $region52
      $region51: #{tpu_custom_call.1} parent=5 // pred_region
        %s1491 = ssub.s32 %s16, 2
        // Predicated region
        $region53: #{tpu_custom_call.1} parent=51 // pred_check
          %p1492 = pneg %p113
        $region54: #{tpu_custom_call.1} parent=51 // pred_check_branch
          %1494 = sbr.rel (%p1492) target = $region56
        $region55: #{tpu_custom_call.1} parent=51 // pred_region
          %s1495 = sand.u32 %s98, 1
          %s1496 = scalar_lea.sflag [#allocation4], %s1495
          %s1497 = sand.u32 %s98, 1
          %s1498 = smul.addr %s1497, 16
          %s1499 = scalar_lea.vmem [#allocation8], %s1498
          %1500 = dma.done %s1496, 256
        $region56: #{tpu_custom_call.1} parent=51 // pred_fallthru
          _
      $region52: #{tpu_custom_call.1} parent=5 // pred_fallthru
        _
    $region6: #{tpu_custom_call.1} parent=1 // loop_footer
      %s20 = sadd.s32 1, %s16
    $region7: #{tpu_custom_call.1} parent=1 // loop_footer_branch
      %15 = sbr.rel target = $region3
    $region8: #{tpu_custom_call.1} parent=1 // loop_exit
      _
    %1501 = vsyncpa [#allocation3], 1
    %s1502 = scalar_lea.sflag [#allocation3], 1
    %1503 = vsyncpa %s1502, 1
    %1504 = vsyncpa [#allocation6], 1
    %1505 = vsyncpa [#allocation4], 1
    %s1506 = scalar_lea.sflag [#allocation4], 1
    %1507 = vsyncpa %s1506, 1

</llo_original>
